<compile_context>
chip_gen: v7x
topology: tpu7x:2x2x1
jax: 0.10.0
libtpu: 0.0.40
codegen_flags: <defaults>
</compile_context>

<pallas_src>
import functools

import jax
import jax.numpy as jnp
from jax import lax
from jax.experimental import pallas as pl
from jax.experimental.pallas import tpu as pltpu


def _round_up(x, m):
    return ((x + m - 1) // m) * m


def _pick_time_chunk(S, max_chunk=32):
    """Largest chunk in (max_chunk/2, max_chunk] minimizing last-chunk padding."""
    if S <= max_chunk:
        return S
    best, best_pad = max_chunk, (-S) % max_chunk
    for tc in range(max_chunk, max_chunk // 2, -1):
        pad = (-S) % tc
        if pad < best_pad:
            best, best_pad = tc, pad
            if pad == 0:
                break
    return best


# --------------------------------------------------------------------------- #
# Tiled dense:  y = x @ w_t + b   (K-tiled, f32 VMEM accumulator)
# --------------------------------------------------------------------------- #
def _dense_kernel(x_ref, w_ref, b_ref, o_ref, acc_ref):
    @pl.when(pl.program_id(2) == 0)
    def _():
        acc_ref[...] = jnp.zeros_like(acc_ref)

    acc_ref[...] += jnp.dot(x_ref[...], w_ref[...],
                            preferred_element_type=jnp.float32)

    @pl.when(pl.program_id(2) == pl.num_programs(2) - 1)
    def _():
        o_ref[...] = (acc_ref[...] + b_ref[...]).astype(o_ref.dtype)


def dense(x2d, w_t, b, n_out):
    """y = x2d @ w_t + b.

    x2d : (M, K) float (cast to bf16)
    w_t : (Kp, Np) bf16, pre-transposed / pre-padded (Kp, Np multiples of tiles)
    b   : (1, Np) f32
    Returns (M, n_out) f32.
    """
    M, K = x2d.shape
    Kp, Np = w_t.shape
    tm = min(512, _round_up(M, 8))
    Mp = _round_up(M, tm)
    tk = min(512, Kp)
    tn = min(512, Np)

    x = x2d.astype(jnp.bfloat16)
    if (Mp, Kp) != (M, K):
        x = jnp.pad(x, ((0, Mp - M), (0, Kp - K)))

    out = pl.pallas_call(
        _dense_kernel,
        out_shape=jax.ShapeDtypeStruct((Mp, Np), jnp.float32),
        grid_spec=pltpu.PrefetchScalarGridSpec(
            num_scalar_prefetch=0,
            grid=(Mp // tm, Np // tn, Kp // tk),
            in_specs=[
                pl.BlockSpec((tm, tk), lambda i, j, k: (i, k)),
                pl.BlockSpec((tk, tn), lambda i, j, k: (k, j)),
                pl.BlockSpec((1, tn), lambda i, j, k: (0, j)),
            ],
            out_specs=pl.BlockSpec((tm, tn), lambda i, j, k: (i, j)),
            scratch_shapes=[pltpu.VMEM((tm, tn), jnp.float32)],
        ),
        compiler_params=pltpu.CompilerParams(
            dimension_semantics=("parallel", "parallel", "arbitrary"),
            vmem_limit_bytes=32 * 1024 * 1024),
    )(x, w_t, b)
    return out[:M, :n_out]


# --------------------------------------------------------------------------- #
# LSTM layer: fused input projection + chunked recurrence
# --------------------------------------------------------------------------- #
def _lstm_chunk_kernel(x_ref, h0_ref, c0_ref, bias_ref, wih_hbm, whh_hbm,
                       hseq_ref, hN_ref, cN_ref,
                       wih_sc, whh_sc, gx_sc, h_sc, c_sc, dma_sem,
                       *, s_valid, s_padded, time_chunk):
    t_idx = pl.program_id(1)
    Tc = time_chunk
    tb, Hp = h_sc.shape

    # First time-chunk of a batch tile: single-copy the resident weights into
    # VMEM scratch (no pipeline double-buffering) and init the recurrent state.
    @pl.when(t_idx == 0)
    def _():
        cp_ih = pltpu.make_async_copy(wih_hbm, wih_sc, dma_sem.at[0])
        cp_hh = pltpu.make_async_copy(whh_hbm, whh_sc, dma_sem.at[1])
        cp_ih.start()
        cp_hh.start()
        cp_ih.wait()
        cp_hh.wait()
        h_sc[...] = h0_ref[...]
        c_sc[...] = c0_ref[...]

    # Fused, time-parallel input projection for the whole chunk:
    # one MXU matmul over Tc*tb rows -> gates pre-activations in f32 VMEM.
    x2d = x_ref[...].reshape(Tc * tb, x_ref.shape[-1])
    gx_sc[...] = (jnp.dot(x2d, wih_sc[...], preferred_element_type=jnp.float32)
                  + bias_ref[...])

    whh = whh_sc[...]

    def step(i, carry):
        h, c = carry
        row = pl.multiple_of(i * tb, tb)
        gates = gx_sc[pl.ds(row, tb), :] + jnp.dot(
            h.astype(whh.dtype), whh, preferred_element_type=jnp.float32)
        # PyTorch gate order: i, f, g, o  (each Hp lanes -> lane-dense slices)
        i_g = jax.nn.sigmoid(gates[:, 0 * Hp:1 * Hp])
        f_g = jax.nn.sigmoid(gates[:, 1 * Hp:2 * Hp])
        g_g = jnp.tanh(gates[:, 2 * Hp:3 * Hp])
        o_g = jax.nn.sigmoid(gates[:, 3 * Hp:4 * Hp])
        c_new = f_g * c + i_g * g_g
        h_new = o_g * jnp.tanh(c_new)
        hseq_ref[i] = h_new.astype(hseq_ref.dtype)
        if s_padded != s_valid:
            # Freeze the state on padded (masked) trailing time steps.
            valid = (t_idx * Tc + i) < s_valid
            h_new = jnp.where(valid, h_new, h)
            c_new = jnp.where(valid, c_new, c)
        return h_new, c_new

    h, c = lax.fori_loop(0, Tc, step, (h_sc[...], c_sc[...]),
                         unroll=min(8, Tc))
    h_sc[...] = h
    c_sc[...] = c

    @pl.when(t_idx == pl.num_programs(1) - 1)
    def _():
        hN_ref[...] = h.astype(hN_ref.dtype)
        cN_ref[...] = c.astype(cN_ref.dtype)


def lstm_layer(x_seq, h0, c0, wih_t, whh_t, bias, *, s_valid, time_chunk):
    """One LSTM layer over the (already padded) sequence.

    x_seq : (Sp, Bp, Inp) bf16    h0/c0 : (Bp, Hp) f32
    wih_t : (Inp, 4Hp) bf16       whh_t : (Hp, 4Hp) bf16    bias : (1, 4Hp) f32
    Returns h_seq (Sp,Bp,Hp) bf16, h_N (Bp,Hp) f32, c_N (Bp,Hp) f32.
    """
    Sp, Bp, Inp = x_seq.shape
    Hp = h0.shape[-1]
    Tc = time_chunk
    assert Sp % Tc == 0
    nt = Sp // Tc
    # Batch-split grid axis (parallel) -> both v7x TensorCores busy when B>=16.
    nb = 2 if (Bp >= 16 and Bp % 16 == 0) else 1
    tb = Bp // nb

    kernel = functools.partial(_lstm_chunk_kernel, s_valid=s_valid,
                               s_padded=Sp, time_chunk=Tc)

    grid_spec = pltpu.PrefetchScalarGridSpec(
        num_scalar_prefetch=0,
        grid=(nb, nt),                                          # b outer, t inner
        in_specs=[
            pl.BlockSpec((Tc, tb, Inp), lambda b, t: (t, b, 0)),   # x chunk
            pl.BlockSpec((tb, Hp), lambda b, t: (b, 0)),           # h0
            pl.BlockSpec((tb, Hp), lambda b, t: (b, 0)),           # c0
            pl.BlockSpec((1, 4 * Hp), lambda b, t: (0, 0)),        # bias
            pl.BlockSpec(memory_space=pl.ANY),                     # W_ih^T (HBM)
            pl.BlockSpec(memory_space=pl.ANY),                     # W_hh^T (HBM)
        ],
        out_specs=[
            pl.BlockSpec((Tc, tb, Hp), lambda b, t: (t, b, 0)),    # h_seq (bf16)
            pl.BlockSpec((tb, Hp), lambda b, t: (b, 0)),           # h_N
            pl.BlockSpec((tb, Hp), lambda b, t: (b, 0)),           # c_N
        ],
        scratch_shapes=[
            pltpu.VMEM((Inp, 4 * Hp), jnp.bfloat16),       # resident W_ih^T
            pltpu.VMEM((Hp, 4 * Hp), jnp.bfloat16),        # resident W_hh^T
            pltpu.VMEM((Tc * tb, 4 * Hp), jnp.float32),    # chunk gate pre-acts
            pltpu.VMEM((tb, Hp), jnp.float32),             # h carry
            pltpu.VMEM((tb, Hp), jnp.float32),             # c carry
            pltpu.SemaphoreType.DMA((2,)),                 # weight copy sems
        ],
    )
    return pl.pallas_call(
        kernel,
        out_shape=(jax.ShapeDtypeStruct((Sp, Bp, Hp), jnp.bfloat16),
                   jax.ShapeDtypeStruct((Bp, Hp), jnp.float32),
                   jax.ShapeDtypeStruct((Bp, Hp), jnp.float32)),
        grid_spec=grid_spec,
        compiler_params=pltpu.CompilerParams(
            dimension_semantics=("parallel", "arbitrary"),
            vmem_limit_bytes=48 * 1024 * 1024),
    )(x_seq.astype(jnp.bfloat16), h0, c0, bias, wih_t, whh_t)


# --------------------------------------------------------------------------- #
# Parameters
# --------------------------------------------------------------------------- #
def init_rnn_model_params(key, vocab_size, emb_size, hidden_size, num_layers):
    """Deterministic parameter init mirroring PyTorch shapes / init scheme."""
    keys = jax.random.split(key, 2 + 4 * num_layers + 2)
    params = {}
    params["embedding"] = jax.random.normal(
        keys[0], (vocab_size, emb_size), jnp.float32)
    k = 1.0 / jnp.sqrt(hidden_size)
    layers = []
    for l in range(num_layers):
        in_size = emb_size if l == 0 else hidden_size
        kk = keys[1 + 4 * l: 1 + 4 * (l + 1)]
        layers.append({
            "w_ih": jax.random.uniform(kk[0], (4 * hidden_size, in_size),
                                       jnp.float32, -k, k),
            "w_hh": jax.random.uniform(kk[1], (4 * hidden_size, hidden_size),
                                       jnp.float32, -k, k),
            "b_ih": jax.random.uniform(kk[2], (4 * hidden_size,),
                                       jnp.float32, -k, k),
            "b_hh": jax.random.uniform(kk[3], (4 * hidden_size,),
                                       jnp.float32, -k, k),
        })
    params["lstm"] = layers
    params["lin_w"] = jax.random.uniform(
        keys[-2], (vocab_size, hidden_size), jnp.float32, -k, k)
    params["lin_b"] = jax.random.uniform(
        keys[-1], (vocab_size,), jnp.float32, -k, k)
    return params


def _pad_gate_rows(w, H, Hp):
    """(4H, ...) -> (4Hp, ...): zero-pad each of the i,f,g,o blocks to Hp rows."""
    if Hp == H:
        return w
    tail = w.shape[1:]
    w = w.reshape((4, H) + tail)
    w = jnp.pad(w, [(0, 0), (0, Hp - H)] + [(0, 0)] * len(tail))
    return w.reshape((4 * Hp,) + tail)


def prepare_params(params):
    """One-time weight prep: gate/lane padding, transpose, bf16 cast."""
    emb = params["embedding"]
    V, E = emb.shape
    H = params["lstm"][0]["w_hh"].shape[1]
    Ep = _round_up(E, 128)
    Hp = _round_up(H, 128)

    prep = {"V": V, "E": E, "H": H, "Ep": Ep, "Hp": Hp}
    prep["embedding"] = jnp.pad(emb, ((0, 0), (0, Ep - E))).astype(jnp.bfloat16)

    layers = []
    for l, lp in enumerate(params["lstm"]):
        In = E if l == 0 else H
        Inp = Ep if l == 0 else Hp
        wih = _pad_gate_rows(lp["w_ih"], H, Hp)                  # (4Hp, In)
        wih = jnp.pad(wih, ((0, 0), (0, Inp - In)))              # (4Hp, Inp)
        whh = _pad_gate_rows(lp["w_hh"], H, Hp)                  # (4Hp, H)
        whh = jnp.pad(whh, ((0, 0), (0, Hp - H)))                # (4Hp, Hp)
        bias = _pad_gate_rows((lp["b_ih"] + lp["b_hh"])[:, None], H, Hp)
        layers.append({
            "wih_t": wih.T.astype(jnp.bfloat16),                 # (Inp, 4Hp)
            "whh_t": whh.T.astype(jnp.bfloat16),                 # (Hp, 4Hp)
            "bias": bias.reshape(1, 4 * Hp).astype(jnp.float32),
        })
    prep["lstm"] = layers

    # Final Linear: pre-transpose / pre-pad to the dense kernel's tiles.
    lw = jnp.pad(params["lin_w"], ((0, 0), (0, Hp - H))).T       # (Hp, V)
    tk = min(512, _round_up(Hp, 128))
    Kp = _round_up(Hp, tk)
    tn = min(512, _round_up(V, 128))
    Vp = _round_up(V, tn)
    prep["lin_w_t"] = jnp.pad(lw, ((0, Kp - Hp), (0, Vp - V))).astype(jnp.bfloat16)
    prep["lin_b"] = jnp.pad(params["lin_b"], (0, Vp - V)).reshape(1, Vp
                                                                  ).astype(jnp.float32)
    return prep


# --------------------------------------------------------------------------- #
# Forward pass
# --------------------------------------------------------------------------- #
def rnn_model_forward(prep, tokens, hidden):
    """tokens (S,B) int32; hidden = (h0, c0) each (L,B,H) f32.

    Returns (out (S,B,V) f32, (h_n, c_n) each (L,B,H) f32).
    """
    h0_all, c0_all = hidden
    S, B = tokens.shape
    H, Hp, V = prep["H"], prep["Hp"], prep["V"]

    # Pad batch (sublanes / optional megacore split) and time (chunk) once.
    Bp = _round_up(B, 16) if B > 8 else _round_up(B, 8)
    Tc = _pick_time_chunk(S)
    Sp = _round_up(S, Tc)

    # Embedding gather kept in plain JAX (cheap glue).
    emb = jnp.take(prep["embedding"], tokens, axis=0)            # (S,B,Ep) bf16
    x = jnp.pad(emb, ((0, Sp - S), (0, Bp - B), (0, 0)))

    h0p = jnp.pad(h0_all.astype(jnp.float32),
                  ((0, 0), (0, Bp - B), (0, Hp - H)))
    c0p = jnp.pad(c0_all.astype(jnp.float32),
                  ((0, 0), (0, Bp - B), (0, Hp - H)))

    h_fin, c_fin = [], []
    for l, lp in enumerate(prep["lstm"]):
        x, h_n, c_n = lstm_layer(x, h0p[l], c0p[l],
                                 lp["wih_t"], lp["whh_t"], lp["bias"],
                                 s_valid=S, time_chunk=Tc)
        h_fin.append(h_n)
        c_fin.append(c_n)

    # Final vocab projection over all Sp*Bp rows as one K-tiled dense.
    out = dense(x.reshape(Sp * Bp, Hp), prep["lin_w_t"], prep["lin_b"], V)
    out = out.reshape(Sp, Bp, V)[:S, :B]

    h_n = jnp.stack(h_fin, axis=0)[:, :B, :H]
    c_n = jnp.stack(c_fin, axis=0)[:, :B, :H]
    # .detach() has no analogue needed (no autograd graph here).
    return out, (h_n, c_n)


if __name__ == "__main__":
    vocab_size, emb_size, hidden_size, num_layers = 32, 16, 32, 2
    seq_len, batch = 8, 4

    key = jax.random.PRNGKey(0)
    k_par, k_tok = jax.random.split(key)
    params = init_rnn_model_params(k_par, vocab_size, emb_size,
                                   hidden_size, num_layers)
    prep = prepare_params(params)   # one-time transpose / pad / bf16 cast

    tokens = jax.random.randint(k_tok, (seq_len, batch), 0, vocab_size,
                                dtype=jnp.int32)
    h0 = jnp.zeros((num_layers, batch, hidden_size), jnp.float32)
    c0 = jnp.zeros((num_layers, batch, hidden_size), jnp.float32)

    out, (h_n, c_n) = rnn_model_forward(prep, tokens, (h0, c0))
    jax.block_until_ready((out, h_n, c_n))

    assert out.shape == (seq_len, batch, vocab_size)
    assert h_n.shape == (num_layers, batch, hidden_size)
    assert c_n.shape == (num_layers, batch, hidden_size)
    print("KERNEL_OK")
</pallas_src>

<mosaic_0001>
module attributes {stable_mosaic.version = 11 : i64} {
  func.func @_lstm_chunk_kernel(%arg0: i32, %arg1: i32, %arg2: memref<8x8x128xbf16, #tpu.memory_space<vmem>>, %arg3: memref<8x128xf32, #tpu.memory_space<vmem>>, %arg4: memref<8x128xf32, #tpu.memory_space<vmem>>, %arg5: memref<1x512xf32, #tpu.memory_space<vmem>>, %arg6: memref<128x512xbf16, #tpu.memory_space<any>>, %arg7: memref<128x512xbf16, #tpu.memory_space<any>>, %arg8: memref<8x8x128xbf16, #tpu.memory_space<vmem>>, %arg9: memref<8x128xf32, #tpu.memory_space<vmem>>, %arg10: memref<8x128xf32, #tpu.memory_space<vmem>>, %arg11: memref<128x512xbf16, #tpu.memory_space<vmem>>, %arg12: memref<128x512xbf16, #tpu.memory_space<vmem>>, %arg13: memref<64x512xf32, #tpu.memory_space<vmem>>, %arg14: memref<8x128xf32, #tpu.memory_space<vmem>>, %arg15: memref<8x128xf32, #tpu.memory_space<vmem>>, %arg16: memref<2x!tpu.dma_semaphore, #tpu.memory_space<semaphore_mem>>) attributes {dimension_semantics = [#tpu.dimension_semantics<parallel>, #tpu.dimension_semantics<arbitrary>], iteration_bounds = array<i64: 1, 1>, scalar_prefetch = 0 : i64, scratch_operands = 6 : i64, tpu.core_type = #tpu.core_type<tc>, window_params = [{transform_indices = @transform_0, window_bounds = array<i64: 8, 8, 128>}, {transform_indices = @transform_1, window_bounds = array<i64: 8, 128>}, {transform_indices = @transform_2, window_bounds = array<i64: 8, 128>}, {pipeline_mode = #tpu.pipeline_mode<synchronous>, transform_indices = @transform_3, window_bounds = array<i64: 1, 512>}, {}, {}, {transform_indices = @transform_6, window_bounds = array<i64: 8, 8, 128>}, {transform_indices = @transform_7, window_bounds = array<i64: 8, 128>}, {transform_indices = @transform_8, window_bounds = array<i64: 8, 128>}]} {
    %c0_i32 = arith.constant 0 : i32
    %0 = arith.cmpi eq, %arg1, %c0_i32 : i32
    %1 = arith.extui %0 : i1 to i32
    %c0_i32_0 = arith.constant 0 : i32
    %2 = arith.cmpi ne, %1, %c0_i32_0 : i32
    scf.if %2 {
      %c0_i32_86 = arith.constant 0 : i32
      %315 = tpu.memref_slice %arg16[%c0_i32_86] : memref<2x!tpu.dma_semaphore, #tpu.memory_space<semaphore_mem>> -> memref<1x!tpu.dma_semaphore, #tpu.memory_space<semaphore_mem>>
      %316 = tpu.memref_squeeze %315 : memref<1x!tpu.dma_semaphore, #tpu.memory_space<semaphore_mem>> -> memref<!tpu.dma_semaphore, #tpu.memory_space<semaphore_mem>>
      tpu.enqueue_dma source(%arg6 : memref<128x512xbf16, #tpu.memory_space<any>>) target(%arg11 : memref<128x512xbf16, #tpu.memory_space<vmem>>) target_semaphore(%316 : memref<!tpu.dma_semaphore, #tpu.memory_space<semaphore_mem>>)
      %c1_i32_87 = arith.constant 1 : i32
      %317 = tpu.memref_slice %arg16[%c1_i32_87] : memref<2x!tpu.dma_semaphore, #tpu.memory_space<semaphore_mem>> -> memref<1x!tpu.dma_semaphore, #tpu.memory_space<semaphore_mem>>
      %318 = tpu.memref_squeeze %317 : memref<1x!tpu.dma_semaphore, #tpu.memory_space<semaphore_mem>> -> memref<!tpu.dma_semaphore, #tpu.memory_space<semaphore_mem>>
      tpu.enqueue_dma source(%arg7 : memref<128x512xbf16, #tpu.memory_space<any>>) target(%arg12 : memref<128x512xbf16, #tpu.memory_space<vmem>>) target_semaphore(%318 : memref<!tpu.dma_semaphore, #tpu.memory_space<semaphore_mem>>)
      %c0_i32_88 = arith.constant 0 : i32
      %319 = tpu.memref_slice %arg16[%c0_i32_88] : memref<2x!tpu.dma_semaphore, #tpu.memory_space<semaphore_mem>> -> memref<1x!tpu.dma_semaphore, #tpu.memory_space<semaphore_mem>>
      %320 = tpu.memref_squeeze %319 : memref<1x!tpu.dma_semaphore, #tpu.memory_space<semaphore_mem>> -> memref<!tpu.dma_semaphore, #tpu.memory_space<semaphore_mem>>
      tpu.wait_dma2 semaphore(%320 : memref<!tpu.dma_semaphore, #tpu.memory_space<semaphore_mem>>) src(%arg6 : memref<128x512xbf16, #tpu.memory_space<any>>) dst(%arg11 : memref<128x512xbf16, #tpu.memory_space<vmem>>)
      %c1_i32_89 = arith.constant 1 : i32
      %321 = tpu.memref_slice %arg16[%c1_i32_89] : memref<2x!tpu.dma_semaphore, #tpu.memory_space<semaphore_mem>> -> memref<1x!tpu.dma_semaphore, #tpu.memory_space<semaphore_mem>>
      %322 = tpu.memref_squeeze %321 : memref<1x!tpu.dma_semaphore, #tpu.memory_space<semaphore_mem>> -> memref<!tpu.dma_semaphore, #tpu.memory_space<semaphore_mem>>
      tpu.wait_dma2 semaphore(%322 : memref<!tpu.dma_semaphore, #tpu.memory_space<semaphore_mem>>) src(%arg7 : memref<128x512xbf16, #tpu.memory_space<any>>) dst(%arg12 : memref<128x512xbf16, #tpu.memory_space<vmem>>)
      %c0_90 = arith.constant 0 : index
      %c0_91 = arith.constant 0 : index
      %323 = vector.load %arg3[%c0_90, %c0_91] : memref<8x128xf32, #tpu.memory_space<vmem>>, vector<8x128xf32>
      %c0_92 = arith.constant 0 : index
      %c0_93 = arith.constant 0 : index
      %324 = vector.load %arg14[%c0_92, %c0_93] : memref<8x128xf32, #tpu.memory_space<vmem>>, vector<8x128xf32>
      tpu.vector_store %arg14[%c0_92, %c0_93], %323 {strides = array<i32>} : memref<8x128xf32, #tpu.memory_space<vmem>>, vector<8x128xf32>,
      %c0_94 = arith.constant 0 : index
      %c0_95 = arith.constant 0 : index
      %325 = vector.load %arg4[%c0_94, %c0_95] : memref<8x128xf32, #tpu.memory_space<vmem>>, vector<8x128xf32>
      %c0_96 = arith.constant 0 : index
      %c0_97 = arith.constant 0 : index
      %326 = vector.load %arg15[%c0_96, %c0_97] : memref<8x128xf32, #tpu.memory_space<vmem>>, vector<8x128xf32>
      tpu.vector_store %arg15[%c0_96, %c0_97], %325 {strides = array<i32>} : memref<8x128xf32, #tpu.memory_space<vmem>>, vector<8x128xf32>,
    } else {
    }
    %c0 = arith.constant 0 : index
    %c0_1 = arith.constant 0 : index
    %c0_2 = arith.constant 0 : index
    %3 = vector.load %arg2[%c0, %c0_1, %c0_2] : memref<8x8x128xbf16, #tpu.memory_space<vmem>>, vector<8x8x128xbf16>
    %4 = vector.shape_cast %3 : vector<8x8x128xbf16> to vector<64x128xbf16>
    %c0_3 = arith.constant 0 : index
    %c0_4 = arith.constant 0 : index
    %5 = vector.load %arg11[%c0_3, %c0_4] : memref<128x512xbf16, #tpu.memory_space<vmem>>, vector<128x512xbf16>
    %cst = arith.constant dense<0.000000e+00> : vector<64x512xf32>
    %6 = tpu.matmul %4, %5, %cst {dimension_numbers = #tpu.dot_dimension_numbers<[1], [0], [0], [1], [0, 0, 1, 1], [], []>} : vector<64x128xbf16>, vector<128x512xbf16>, vector<64x512xf32> -> vector<64x512xf32>
    %c0_5 = arith.constant 0 : index
    %c0_6 = arith.constant 0 : index
    %7 = vector.load %arg5[%c0_5, %c0_6] : memref<1x512xf32, #tpu.memory_space<vmem>>, vector<1x512xf32>
    %8 = vector.broadcast %7 : vector<1x512xf32> to vector<64x512xf32>
    %9 = arith.addf %6, %8 : vector<64x512xf32>
    %c0_7 = arith.constant 0 : index
    %c0_8 = arith.constant 0 : index
    %10 = vector.load %arg13[%c0_7, %c0_8] : memref<64x512xf32, #tpu.memory_space<vmem>>, vector<64x512xf32>
    tpu.vector_store %arg13[%c0_7, %c0_8], %9 {strides = array<i32>} : memref<64x512xf32, #tpu.memory_space<vmem>>, vector<64x512xf32>,
    %c0_9 = arith.constant 0 : index
    %c0_10 = arith.constant 0 : index
    %11 = vector.load %arg12[%c0_9, %c0_10] : memref<128x512xbf16, #tpu.memory_space<vmem>>, vector<128x512xbf16>
    %c0_11 = arith.constant 0 : index
    %c0_12 = arith.constant 0 : index
    %12 = vector.load %arg14[%c0_11, %c0_12] : memref<8x128xf32, #tpu.memory_space<vmem>>, vector<8x128xf32>
    %c0_13 = arith.constant 0 : index
    %c0_14 = arith.constant 0 : index
    %13 = vector.load %arg15[%c0_13, %c0_14] : memref<8x128xf32, #tpu.memory_space<vmem>>, vector<8x128xf32>
    %c0_i32_15 = arith.constant 0 : i32
    %c8_i32 = arith.constant 8 : i32
    %14 = arith.muli %c0_i32_15, %c8_i32 : i32
    %15 = tpu.assume_multiple %14, 8 : i32
    %16 = arith.index_cast %15 : i32 to index
    %c0_16 = arith.constant 0 : index
    %17 = vector.load %arg13[%16, %c0_16] : memref<64x512xf32, #tpu.memory_space<vmem>>, vector<8x512xf32>
    %18 = arith.truncf %12 : vector<8x128xf32> to vector<8x128xbf16>
    %cst_17 = arith.constant dense<0.000000e+00> : vector<8x512xf32>
    %19 = tpu.matmul %18, %11, %cst_17 {dimension_numbers = #tpu.dot_dimension_numbers<[1], [0], [0], [1], [0, 0, 1, 1], [], []>} : vector<8x128xbf16>, vector<128x512xbf16>, vector<8x512xf32> -> vector<8x512xf32>
    %20 = arith.addf %17, %19 : vector<8x512xf32>
    %21 = vector.extract_strided_slice %20 {offsets = [0, 0], sizes = [8, 128], strides = [1, 1]} : vector<8x512xf32> to vector<8x128xf32>
    %22 = arith.negf %21 : vector<8x128xf32>
    %23 = math.exp %22 : vector<8x128xf32>
    %cst_18 = arith.constant 1.000000e+00 : f32
    %24 = vector.broadcast %cst_18 : f32 to vector<8x128xf32>
    %25 = arith.addf %24, %23 : vector<8x128xf32>
    %26 = arith.divf %24, %25 : vector<8x128xf32>
    %27 = vector.extract_strided_slice %20 {offsets = [0, 128], sizes = [8, 128], strides = [1, 1]} : vector<8x512xf32> to vector<8x128xf32>
    %28 = arith.negf %27 : vector<8x128xf32>
    %29 = math.exp %28 : vector<8x128xf32>
    %cst_19 = arith.constant 1.000000e+00 : f32
    %30 = vector.broadcast %cst_19 : f32 to vector<8x128xf32>
    %31 = arith.addf %30, %29 : vector<8x128xf32>
    %32 = arith.divf %30, %31 : vector<8x128xf32>
    %33 = vector.extract_strided_slice %20 {offsets = [0, 256], sizes = [8, 128], strides = [1, 1]} : vector<8x512xf32> to vector<8x128xf32>
    %34 = math.tanh %33 : vector<8x128xf32>
    %35 = vector.extract_strided_slice %20 {offsets = [0, 384], sizes = [8, 128], strides = [1, 1]} : vector<8x512xf32> to vector<8x128xf32>
    %36 = arith.negf %35 : vector<8x128xf32>
    %37 = math.exp %36 : vector<8x128xf32>
    %cst_20 = arith.constant 1.000000e+00 : f32
    %38 = vector.broadcast %cst_20 : f32 to vector<8x128xf32>
    %39 = arith.addf %38, %37 : vector<8x128xf32>
    %40 = arith.divf %38, %39 : vector<8x128xf32>
    %41 = arith.mulf %32, %13 : vector<8x128xf32>
    %42 = arith.mulf %26, %34 : vector<8x128xf32>
    %43 = arith.addf %41, %42 : vector<8x128xf32>
    %44 = math.tanh %43 : vector<8x128xf32>
    %45 = arith.mulf %40, %44 : vector<8x128xf32>
    %46 = arith.truncf %45 : vector<8x128xf32> to vector<8x128xbf16>
    %47 = arith.index_cast %c0_i32_15 : i32 to index
    %c0_21 = arith.constant 0 : index
    %c0_22 = arith.constant 0 : index
    %48 = vector.load %arg8[%47, %c0_21, %c0_22] : memref<8x8x128xbf16, #tpu.memory_space<vmem>>, vector<1x8x128xbf16>
    %49 = vector.shape_cast %48 : vector<1x8x128xbf16> to vector<8x128xbf16>
    %50 = vector.shape_cast %46 : vector<8x128xbf16> to vector<1x8x128xbf16>
    tpu.vector_store %arg8[%47, %c0_21, %c0_22], %50 {strides = array<i32>} : memref<8x8x128xbf16, #tpu.memory_space<vmem>>, vector<1x8x128xbf16>,
    %c1_i32 = arith.constant 1 : i32
    %c8_i32_23 = arith.constant 8 : i32
    %51 = arith.muli %c1_i32, %c8_i32_23 : i32
    %52 = tpu.assume_multiple %51, 8 : i32
    %53 = arith.index_cast %52 : i32 to index
    %c0_24 = arith.constant 0 : index
    %54 = vector.load %arg13[%53, %c0_24] : memref<64x512xf32, #tpu.memory_space<vmem>>, vector<8x512xf32>
    %55 = arith.truncf %45 : vector<8x128xf32> to vector<8x128xbf16>
    %cst_25 = arith.constant dense<0.000000e+00> : vector<8x512xf32>
    %56 = tpu.matmul %55, %11, %cst_25 {dimension_numbers = #tpu.dot_dimension_numbers<[1], [0], [0], [1], [0, 0, 1, 1], [], []>} : vector<8x128xbf16>, vector<128x512xbf16>, vector<8x512xf32> -> vector<8x512xf32>
    %57 = arith.addf %54, %56 : vector<8x512xf32>
    %58 = vector.extract_strided_slice %57 {offsets = [0, 0], sizes = [8, 128], strides = [1, 1]} : vector<8x512xf32> to vector<8x128xf32>
    %59 = arith.negf %58 : vector<8x128xf32>
    %60 = math.exp %59 : vector<8x128xf32>
    %cst_26 = arith.constant 1.000000e+00 : f32
    %61 = vector.broadcast %cst_26 : f32 to vector<8x128xf32>
    %62 = arith.addf %61, %60 : vector<8x128xf32>
    %63 = arith.divf %61, %62 : vector<8x128xf32>
    %64 = vector.extract_strided_slice %57 {offsets = [0, 128], sizes = [8, 128], strides = [1, 1]} : vector<8x512xf32> to vector<8x128xf32>
    %65 = arith.negf %64 : vector<8x128xf32>
    %66 = math.exp %65 : vector<8x128xf32>
    %cst_27 = arith.constant 1.000000e+00 : f32
    %67 = vector.broadcast %cst_27 : f32 to vector<8x128xf32>
    %68 = arith.addf %67, %66 : vector<8x128xf32>
    %69 = arith.divf %67, %68 : vector<8x128xf32>
    %70 = vector.extract_strided_slice %57 {offsets = [0, 256], sizes = [8, 128], strides = [1, 1]} : vector<8x512xf32> to vector<8x128xf32>
    %71 = math.tanh %70 : vector<8x128xf32>
    %72 = vector.extract_strided_slice %57 {offsets = [0, 384], sizes = [8, 128], strides = [1, 1]} : vector<8x512xf32> to vector<8x128xf32>
    %73 = arith.negf %72 : vector<8x128xf32>
    %74 = math.exp %73 : vector<8x128xf32>
    %cst_28 = arith.constant 1.000000e+00 : f32
    %75 = vector.broadcast %cst_28 : f32 to vector<8x128xf32>
    %76 = arith.addf %75, %74 : vector<8x128xf32>
    %77 = arith.divf %75, %76 : vector<8x128xf32>
    %78 = arith.mulf %69, %43 : vector<8x128xf32>
    %79 = arith.mulf %63, %71 : vector<8x128xf32>
    %80 = arith.addf %78, %79 : vector<8x128xf32>
    %81 = math.tanh %80 : vector<8x128xf32>
    %82 = arith.mulf %77, %81 : vector<8x128xf32>
    %83 = arith.truncf %82 : vector<8x128xf32> to vector<8x128xbf16>
    %84 = arith.index_cast %c1_i32 : i32 to index
    %c0_29 = arith.constant 0 : index
    %c0_30 = arith.constant 0 : index
    %85 = vector.load %arg8[%84, %c0_29, %c0_30] : memref<8x8x128xbf16, #tpu.memory_space<vmem>>, vector<1x8x128xbf16>
    %86 = vector.shape_cast %85 : vector<1x8x128xbf16> to vector<8x128xbf16>
    %87 = vector.shape_cast %83 : vector<8x128xbf16> to vector<1x8x128xbf16>
    tpu.vector_store %arg8[%84, %c0_29, %c0_30], %87 {strides = array<i32>} : memref<8x8x128xbf16, #tpu.memory_space<vmem>>, vector<1x8x128xbf16>,
    %c2_i32 = arith.constant 2 : i32
    %c8_i32_31 = arith.constant 8 : i32
    %88 = arith.muli %c2_i32, %c8_i32_31 : i32
    %89 = tpu.assume_multiple %88, 8 : i32
    %90 = arith.index_cast %89 : i32 to index
    %c0_32 = arith.constant 0 : index
    %91 = vector.load %arg13[%90, %c0_32] : memref<64x512xf32, #tpu.memory_space<vmem>>, vector<8x512xf32>
    %92 = arith.truncf %82 : vector<8x128xf32> to vector<8x128xbf16>
    %cst_33 = arith.constant dense<0.000000e+00> : vector<8x512xf32>
    %93 = tpu.matmul %92, %11, %cst_33 {dimension_numbers = #tpu.dot_dimension_numbers<[1], [0], [0], [1], [0, 0, 1, 1], [], []>} : vector<8x128xbf16>, vector<128x512xbf16>, vector<8x512xf32> -> vector<8x512xf32>
    %94 = arith.addf %91, %93 : vector<8x512xf32>
    %95 = vector.extract_strided_slice %94 {offsets = [0, 0], sizes = [8, 128], strides = [1, 1]} : vector<8x512xf32> to vector<8x128xf32>
    %96 = arith.negf %95 : vector<8x128xf32>
    %97 = math.exp %96 : vector<8x128xf32>
    %cst_34 = arith.constant 1.000000e+00 : f32
    %98 = vector.broadcast %cst_34 : f32 to vector<8x128xf32>
    %99 = arith.addf %98, %97 : vector<8x128xf32>
    %100 = arith.divf %98, %99 : vector<8x128xf32>
    %101 = vector.extract_strided_slice %94 {offsets = [0, 128], sizes = [8, 128], strides = [1, 1]} : vector<8x512xf32> to vector<8x128xf32>
    %102 = arith.negf %101 : vector<8x128xf32>
    %103 = math.exp %102 : vector<8x128xf32>
    %cst_35 = arith.constant 1.000000e+00 : f32
    %104 = vector.broadcast %cst_35 : f32 to vector<8x128xf32>
    %105 = arith.addf %104, %103 : vector<8x128xf32>
    %106 = arith.divf %104, %105 : vector<8x128xf32>
    %107 = vector.extract_strided_slice %94 {offsets = [0, 256], sizes = [8, 128], strides = [1, 1]} : vector<8x512xf32> to vector<8x128xf32>
    %108 = math.tanh %107 : vector<8x128xf32>
    %109 = vector.extract_strided_slice %94 {offsets = [0, 384], sizes = [8, 128], strides = [1, 1]} : vector<8x512xf32> to vector<8x128xf32>
    %110 = arith.negf %109 : vector<8x128xf32>
    %111 = math.exp %110 : vector<8x128xf32>
    %cst_36 = arith.constant 1.000000e+00 : f32
    %112 = vector.broadcast %cst_36 : f32 to vector<8x128xf32>
    %113 = arith.addf %112, %111 : vector<8x128xf32>
    %114 = arith.divf %112, %113 : vector<8x128xf32>
    %115 = arith.mulf %106, %80 : vector<8x128xf32>
    %116 = arith.mulf %100, %108 : vector<8x128xf32>
    %117 = arith.addf %115, %116 : vector<8x128xf32>
    %118 = math.tanh %117 : vector<8x128xf32>
    %119 = arith.mulf %114, %118 : vector<8x128xf32>
    %120 = arith.truncf %119 : vector<8x128xf32> to vector<8x128xbf16>
    %121 = arith.index_cast %c2_i32 : i32 to index
    %c0_37 = arith.constant 0 : index
    %c0_38 = arith.constant 0 : index
    %122 = vector.load %arg8[%121, %c0_37, %c0_38] : memref<8x8x128xbf16, #tpu.memory_space<vmem>>, vector<1x8x128xbf16>
    %123 = vector.shape_cast %122 : vector<1x8x128xbf16> to vector<8x128xbf16>
    %124 = vector.shape_cast %120 : vector<8x128xbf16> to vector<1x8x128xbf16>
    tpu.vector_store %arg8[%121, %c0_37, %c0_38], %124 {strides = array<i32>} : memref<8x8x128xbf16, #tpu.memory_space<vmem>>, vector<1x8x128xbf16>,
    %c3_i32 = arith.constant 3 : i32
    %c8_i32_39 = arith.constant 8 : i32
    %125 = arith.muli %c3_i32, %c8_i32_39 : i32
    %126 = tpu.assume_multiple %125, 8 : i32
    %127 = arith.index_cast %126 : i32 to index
    %c0_40 = arith.constant 0 : index
    %128 = vector.load %arg13[%127, %c0_40] : memref<64x512xf32, #tpu.memory_space<vmem>>, vector<8x512xf32>
    %129 = arith.truncf %119 : vector<8x128xf32> to vector<8x128xbf16>
    %cst_41 = arith.constant dense<0.000000e+00> : vector<8x512xf32>
    %130 = tpu.matmul %129, %11, %cst_41 {dimension_numbers = #tpu.dot_dimension_numbers<[1], [0], [0], [1], [0, 0, 1, 1], [], []>} : vector<8x128xbf16>, vector<128x512xbf16>, vector<8x512xf32> -> vector<8x512xf32>
    %131 = arith.addf %128, %130 : vector<8x512xf32>
    %132 = vector.extract_strided_slice %131 {offsets = [0, 0], sizes = [8, 128], strides = [1, 1]} : vector<8x512xf32> to vector<8x128xf32>
    %133 = arith.negf %132 : vector<8x128xf32>
    %134 = math.exp %133 : vector<8x128xf32>
    %cst_42 = arith.constant 1.000000e+00 : f32
    %135 = vector.broadcast %cst_42 : f32 to vector<8x128xf32>
    %136 = arith.addf %135, %134 : vector<8x128xf32>
    %137 = arith.divf %135, %136 : vector<8x128xf32>
    %138 = vector.extract_strided_slice %131 {offsets = [0, 128], sizes = [8, 128], strides = [1, 1]} : vector<8x512xf32> to vector<8x128xf32>
    %139 = arith.negf %138 : vector<8x128xf32>
    %140 = math.exp %139 : vector<8x128xf32>
    %cst_43 = arith.constant 1.000000e+00 : f32
    %141 = vector.broadcast %cst_43 : f32 to vector<8x128xf32>
    %142 = arith.addf %141, %140 : vector<8x128xf32>
    %143 = arith.divf %141, %142 : vector<8x128xf32>
    %144 = vector.extract_strided_slice %131 {offsets = [0, 256], sizes = [8, 128], strides = [1, 1]} : vector<8x512xf32> to vector<8x128xf32>
    %145 = math.tanh %144 : vector<8x128xf32>
    %146 = vector.extract_strided_slice %131 {offsets = [0, 384], sizes = [8, 128], strides = [1, 1]} : vector<8x512xf32> to vector<8x128xf32>
    %147 = arith.negf %146 : vector<8x128xf32>
    %148 = math.exp %147 : vector<8x128xf32>
    %cst_44 = arith.constant 1.000000e+00 : f32
    %149 = vector.broadcast %cst_44 : f32 to vector<8x128xf32>
    %150 = arith.addf %149, %148 : vector<8x128xf32>
    %151 = arith.divf %149, %150 : vector<8x128xf32>
    %152 = arith.mulf %143, %117 : vector<8x128xf32>
    %153 = arith.mulf %137, %145 : vector<8x128xf32>
    %154 = arith.addf %152, %153 : vector<8x128xf32>
    %155 = math.tanh %154 : vector<8x128xf32>
    %156 = arith.mulf %151, %155 : vector<8x128xf32>
    %157 = arith.truncf %156 : vector<8x128xf32> to vector<8x128xbf16>
    %158 = arith.index_cast %c3_i32 : i32 to index
    %c0_45 = arith.constant 0 : index
    %c0_46 = arith.constant 0 : index
    %159 = vector.load %arg8[%158, %c0_45, %c0_46] : memref<8x8x128xbf16, #tpu.memory_space<vmem>>, vector<1x8x128xbf16>
    %160 = vector.shape_cast %159 : vector<1x8x128xbf16> to vector<8x128xbf16>
    %161 = vector.shape_cast %157 : vector<8x128xbf16> to vector<1x8x128xbf16>
    tpu.vector_store %arg8[%158, %c0_45, %c0_46], %161 {strides = array<i32>} : memref<8x8x128xbf16, #tpu.memory_space<vmem>>, vector<1x8x128xbf16>,
    %c4_i32 = arith.constant 4 : i32
    %c8_i32_47 = arith.constant 8 : i32
    %162 = arith.muli %c4_i32, %c8_i32_47 : i32
    %163 = tpu.assume_multiple %162, 8 : i32
    %164 = arith.index_cast %163 : i32 to index
    %c0_48 = arith.constant 0 : index
    %165 = vector.load %arg13[%164, %c0_48] : memref<64x512xf32, #tpu.memory_space<vmem>>, vector<8x512xf32>
    %166 = arith.truncf %156 : vector<8x128xf32> to vector<8x128xbf16>
    %cst_49 = arith.constant dense<0.000000e+00> : vector<8x512xf32>
    %167 = tpu.matmul %166, %11, %cst_49 {dimension_numbers = #tpu.dot_dimension_numbers<[1], [0], [0], [1], [0, 0, 1, 1], [], []>} : vector<8x128xbf16>, vector<128x512xbf16>, vector<8x512xf32> -> vector<8x512xf32>
    %168 = arith.addf %165, %167 : vector<8x512xf32>
    %169 = vector.extract_strided_slice %168 {offsets = [0, 0], sizes = [8, 128], strides = [1, 1]} : vector<8x512xf32> to vector<8x128xf32>
    %170 = arith.negf %169 : vector<8x128xf32>
    %171 = math.exp %170 : vector<8x128xf32>
    %cst_50 = arith.constant 1.000000e+00 : f32
    %172 = vector.broadcast %cst_50 : f32 to vector<8x128xf32>
    %173 = arith.addf %172, %171 : vector<8x128xf32>
    %174 = arith.divf %172, %173 : vector<8x128xf32>
    %175 = vector.extract_strided_slice %168 {offsets = [0, 128], sizes = [8, 128], strides = [1, 1]} : vector<8x512xf32> to vector<8x128xf32>
    %176 = arith.negf %175 : vector<8x128xf32>
    %177 = math.exp %176 : vector<8x128xf32>
    %cst_51 = arith.constant 1.000000e+00 : f32
    %178 = vector.broadcast %cst_51 : f32 to vector<8x128xf32>
    %179 = arith.addf %178, %177 : vector<8x128xf32>
    %180 = arith.divf %178, %179 : vector<8x128xf32>
    %181 = vector.extract_strided_slice %168 {offsets = [0, 256], sizes = [8, 128], strides = [1, 1]} : vector<8x512xf32> to vector<8x128xf32>
    %182 = math.tanh %181 : vector<8x128xf32>
    %183 = vector.extract_strided_slice %168 {offsets = [0, 384], sizes = [8, 128], strides = [1, 1]} : vector<8x512xf32> to vector<8x128xf32>
    %184 = arith.negf %183 : vector<8x128xf32>
    %185 = math.exp %184 : vector<8x128xf32>
    %cst_52 = arith.constant 1.000000e+00 : f32
    %186 = vector.broadcast %cst_52 : f32 to vector<8x128xf32>
    %187 = arith.addf %186, %185 : vector<8x128xf32>
    %188 = arith.divf %186, %187 : vector<8x128xf32>
    %189 = arith.mulf %180, %154 : vector<8x128xf32>
    %190 = arith.mulf %174, %182 : vector<8x128xf32>
    %191 = arith.addf %189, %190 : vector<8x128xf32>
    %192 = math.tanh %191 : vector<8x128xf32>
    %193 = arith.mulf %188, %192 : vector<8x128xf32>
    %194 = arith.truncf %193 : vector<8x128xf32> to vector<8x128xbf16>
    %195 = arith.index_cast %c4_i32 : i32 to index
    %c0_53 = arith.constant 0 : index
    %c0_54 = arith.constant 0 : index
    %196 = vector.load %arg8[%195, %c0_53, %c0_54] : memref<8x8x128xbf16, #tpu.memory_space<vmem>>, vector<1x8x128xbf16>
    %197 = vector.shape_cast %196 : vector<1x8x128xbf16> to vector<8x128xbf16>
    %198 = vector.shape_cast %194 : vector<8x128xbf16> to vector<1x8x128xbf16>
    tpu.vector_store %arg8[%195, %c0_53, %c0_54], %198 {strides = array<i32>} : memref<8x8x128xbf16, #tpu.memory_space<vmem>>, vector<1x8x128xbf16>,
    %c5_i32 = arith.constant 5 : i32
    %c8_i32_55 = arith.constant 8 : i32
    %199 = arith.muli %c5_i32, %c8_i32_55 : i32
    %200 = tpu.assume_multiple %199, 8 : i32
    %201 = arith.index_cast %200 : i32 to index
    %c0_56 = arith.constant 0 : index
    %202 = vector.load %arg13[%201, %c0_56] : memref<64x512xf32, #tpu.memory_space<vmem>>, vector<8x512xf32>
    %203 = arith.truncf %193 : vector<8x128xf32> to vector<8x128xbf16>
    %cst_57 = arith.constant dense<0.000000e+00> : vector<8x512xf32>
    %204 = tpu.matmul %203, %11, %cst_57 {dimension_numbers = #tpu.dot_dimension_numbers<[1], [0], [0], [1], [0, 0, 1, 1], [], []>} : vector<8x128xbf16>, vector<128x512xbf16>, vector<8x512xf32> -> vector<8x512xf32>
    %205 = arith.addf %202, %204 : vector<8x512xf32>
    %206 = vector.extract_strided_slice %205 {offsets = [0, 0], sizes = [8, 128], strides = [1, 1]} : vector<8x512xf32> to vector<8x128xf32>
    %207 = arith.negf %206 : vector<8x128xf32>
    %208 = math.exp %207 : vector<8x128xf32>
    %cst_58 = arith.constant 1.000000e+00 : f32
    %209 = vector.broadcast %cst_58 : f32 to vector<8x128xf32>
    %210 = arith.addf %209, %208 : vector<8x128xf32>
    %211 = arith.divf %209, %210 : vector<8x128xf32>
    %212 = vector.extract_strided_slice %205 {offsets = [0, 128], sizes = [8, 128], strides = [1, 1]} : vector<8x512xf32> to vector<8x128xf32>
    %213 = arith.negf %212 : vector<8x128xf32>
    %214 = math.exp %213 : vector<8x128xf32>
    %cst_59 = arith.constant 1.000000e+00 : f32
    %215 = vector.broadcast %cst_59 : f32 to vector<8x128xf32>
    %216 = arith.addf %215, %214 : vector<8x128xf32>
    %217 = arith.divf %215, %216 : vector<8x128xf32>
    %218 = vector.extract_strided_slice %205 {offsets = [0, 256], sizes = [8, 128], strides = [1, 1]} : vector<8x512xf32> to vector<8x128xf32>
    %219 = math.tanh %218 : vector<8x128xf32>
    %220 = vector.extract_strided_slice %205 {offsets = [0, 384], sizes = [8, 128], strides = [1, 1]} : vector<8x512xf32> to vector<8x128xf32>
    %221 = arith.negf %220 : vector<8x128xf32>
    %222 = math.exp %221 : vector<8x128xf32>
    %cst_60 = arith.constant 1.000000e+00 : f32
    %223 = vector.broadcast %cst_60 : f32 to vector<8x128xf32>
    %224 = arith.addf %223, %222 : vector<8x128xf32>
    %225 = arith.divf %223, %224 : vector<8x128xf32>
    %226 = arith.mulf %217, %191 : vector<8x128xf32>
    %227 = arith.mulf %211, %219 : vector<8x128xf32>
    %228 = arith.addf %226, %227 : vector<8x128xf32>
    %229 = math.tanh %228 : vector<8x128xf32>
    %230 = arith.mulf %225, %229 : vector<8x128xf32>
    %231 = arith.truncf %230 : vector<8x128xf32> to vector<8x128xbf16>
    %232 = arith.index_cast %c5_i32 : i32 to index
    %c0_61 = arith.constant 0 : index
    %c0_62 = arith.constant 0 : index
    %233 = vector.load %arg8[%232, %c0_61, %c0_62] : memref<8x8x128xbf16, #tpu.memory_space<vmem>>, vector<1x8x128xbf16>
    %234 = vector.shape_cast %233 : vector<1x8x128xbf16> to vector<8x128xbf16>
    %235 = vector.shape_cast %231 : vector<8x128xbf16> to vector<1x8x128xbf16>
    tpu.vector_store %arg8[%232, %c0_61, %c0_62], %235 {strides = array<i32>} : memref<8x8x128xbf16, #tpu.memory_space<vmem>>, vector<1x8x128xbf16>,
    %c6_i32 = arith.constant 6 : i32
    %c8_i32_63 = arith.constant 8 : i32
    %236 = arith.muli %c6_i32, %c8_i32_63 : i32
    %237 = tpu.assume_multiple %236, 8 : i32
    %238 = arith.index_cast %237 : i32 to index
    %c0_64 = arith.constant 0 : index
    %239 = vector.load %arg13[%238, %c0_64] : memref<64x512xf32, #tpu.memory_space<vmem>>, vector<8x512xf32>
    %240 = arith.truncf %230 : vector<8x128xf32> to vector<8x128xbf16>
    %cst_65 = arith.constant dense<0.000000e+00> : vector<8x512xf32>
    %241 = tpu.matmul %240, %11, %cst_65 {dimension_numbers = #tpu.dot_dimension_numbers<[1], [0], [0], [1], [0, 0, 1, 1], [], []>} : vector<8x128xbf16>, vector<128x512xbf16>, vector<8x512xf32> -> vector<8x512xf32>
    %242 = arith.addf %239, %241 : vector<8x512xf32>
    %243 = vector.extract_strided_slice %242 {offsets = [0, 0], sizes = [8, 128], strides = [1, 1]} : vector<8x512xf32> to vector<8x128xf32>
    %244 = arith.negf %243 : vector<8x128xf32>
    %245 = math.exp %244 : vector<8x128xf32>
    %cst_66 = arith.constant 1.000000e+00 : f32
    %246 = vector.broadcast %cst_66 : f32 to vector<8x128xf32>
    %247 = arith.addf %246, %245 : vector<8x128xf32>
    %248 = arith.divf %246, %247 : vector<8x128xf32>
    %249 = vector.extract_strided_slice %242 {offsets = [0, 128], sizes = [8, 128], strides = [1, 1]} : vector<8x512xf32> to vector<8x128xf32>
    %250 = arith.negf %249 : vector<8x128xf32>
    %251 = math.exp %250 : vector<8x128xf32>
    %cst_67 = arith.constant 1.000000e+00 : f32
    %252 = vector.broadcast %cst_67 : f32 to vector<8x128xf32>
    %253 = arith.addf %252, %251 : vector<8x128xf32>
    %254 = arith.divf %252, %253 : vector<8x128xf32>
    %255 = vector.extract_strided_slice %242 {offsets = [0, 256], sizes = [8, 128], strides = [1, 1]} : vector<8x512xf32> to vector<8x128xf32>
    %256 = math.tanh %255 : vector<8x128xf32>
    %257 = vector.extract_strided_slice %242 {offsets = [0, 384], sizes = [8, 128], strides = [1, 1]} : vector<8x512xf32> to vector<8x128xf32>
    %258 = arith.negf %257 : vector<8x128xf32>
    %259 = math.exp %258 : vector<8x128xf32>
    %cst_68 = arith.constant 1.000000e+00 : f32
    %260 = vector.broadcast %cst_68 : f32 to vector<8x128xf32>
    %261 = arith.addf %260, %259 : vector<8x128xf32>
    %262 = arith.divf %260, %261 : vector<8x128xf32>
    %263 = arith.mulf %254, %228 : vector<8x128xf32>
    %264 = arith.mulf %248, %256 : vector<8x128xf32>
    %265 = arith.addf %263, %264 : vector<8x128xf32>
    %266 = math.tanh %265 : vector<8x128xf32>
    %267 = arith.mulf %262, %266 : vector<8x128xf32>
    %268 = arith.truncf %267 : vector<8x128xf32> to vector<8x128xbf16>
    %269 = arith.index_cast %c6_i32 : i32 to index
    %c0_69 = arith.constant 0 : index
    %c0_70 = arith.constant 0 : index
    %270 = vector.load %arg8[%269, %c0_69, %c0_70] : memref<8x8x128xbf16, #tpu.memory_space<vmem>>, vector<1x8x128xbf16>
    %271 = vector.shape_cast %270 : vector<1x8x128xbf16> to vector<8x128xbf16>
    %272 = vector.shape_cast %268 : vector<8x128xbf16> to vector<1x8x128xbf16>
    tpu.vector_store %arg8[%269, %c0_69, %c0_70], %272 {strides = array<i32>} : memref<8x8x128xbf16, #tpu.memory_space<vmem>>, vector<1x8x128xbf16>,
    %c7_i32 = arith.constant 7 : i32
    %c8_i32_71 = arith.constant 8 : i32
    %273 = arith.muli %c7_i32, %c8_i32_71 : i32
    %274 = tpu.assume_multiple %273, 8 : i32
    %275 = arith.index_cast %274 : i32 to index
    %c0_72 = arith.constant 0 : index
    %276 = vector.load %arg13[%275, %c0_72] : memref<64x512xf32, #tpu.memory_space<vmem>>, vector<8x512xf32>
    %277 = arith.truncf %267 : vector<8x128xf32> to vector<8x128xbf16>
    %cst_73 = arith.constant dense<0.000000e+00> : vector<8x512xf32>
    %278 = tpu.matmul %277, %11, %cst_73 {dimension_numbers = #tpu.dot_dimension_numbers<[1], [0], [0], [1], [0, 0, 1, 1], [], []>} : vector<8x128xbf16>, vector<128x512xbf16>, vector<8x512xf32> -> vector<8x512xf32>
    %279 = arith.addf %276, %278 : vector<8x512xf32>
    %280 = vector.extract_strided_slice %279 {offsets = [0, 0], sizes = [8, 128], strides = [1, 1]} : vector<8x512xf32> to vector<8x128xf32>
    %281 = arith.negf %280 : vector<8x128xf32>
    %282 = math.exp %281 : vector<8x128xf32>
    %cst_74 = arith.constant 1.000000e+00 : f32
    %283 = vector.broadcast %cst_74 : f32 to vector<8x128xf32>
    %284 = arith.addf %283, %282 : vector<8x128xf32>
    %285 = arith.divf %283, %284 : vector<8x128xf32>
    %286 = vector.extract_strided_slice %279 {offsets = [0, 128], sizes = [8, 128], strides = [1, 1]} : vector<8x512xf32> to vector<8x128xf32>
    %287 = arith.negf %286 : vector<8x128xf32>
    %288 = math.exp %287 : vector<8x128xf32>
    %cst_75 = arith.constant 1.000000e+00 : f32
    %289 = vector.broadcast %cst_75 : f32 to vector<8x128xf32>
    %290 = arith.addf %289, %288 : vector<8x128xf32>
    %291 = arith.divf %289, %290 : vector<8x128xf32>
    %292 = vector.extract_strided_slice %279 {offsets = [0, 256], sizes = [8, 128], strides = [1, 1]} : vector<8x512xf32> to vector<8x128xf32>
    %293 = math.tanh %292 : vector<8x128xf32>
    %294 = vector.extract_strided_slice %279 {offsets = [0, 384], sizes = [8, 128], strides = [1, 1]} : vector<8x512xf32> to vector<8x128xf32>
    %295 = arith.negf %294 : vector<8x128xf32>
    %296 = math.exp %295 : vector<8x128xf32>
    %cst_76 = arith.constant 1.000000e+00 : f32
    %297 = vector.broadcast %cst_76 : f32 to vector<8x128xf32>
    %298 = arith.addf %297, %296 : vector<8x128xf32>
    %299 = arith.divf %297, %298 : vector<8x128xf32>
    %300 = arith.mulf %291, %265 : vector<8x128xf32>
    %301 = arith.mulf %285, %293 : vector<8x128xf32>
    %302 = arith.addf %300, %301 : vector<8x128xf32>
    %303 = math.tanh %302 : vector<8x128xf32>
    %304 = arith.mulf %299, %303 : vector<8x128xf32>
    %305 = arith.truncf %304 : vector<8x128xf32> to vector<8x128xbf16>
    %306 = arith.index_cast %c7_i32 : i32 to index
    %c0_77 = arith.constant 0 : index
    %c0_78 = arith.constant 0 : index
    %307 = vector.load %arg8[%306, %c0_77, %c0_78] : memref<8x8x128xbf16, #tpu.memory_space<vmem>>, vector<1x8x128xbf16>
    %308 = vector.shape_cast %307 : vector<1x8x128xbf16> to vector<8x128xbf16>
    %309 = vector.shape_cast %305 : vector<8x128xbf16> to vector<1x8x128xbf16>
    tpu.vector_store %arg8[%306, %c0_77, %c0_78], %309 {strides = array<i32>} : memref<8x8x128xbf16, #tpu.memory_space<vmem>>, vector<1x8x128xbf16>,
    %c8_i32_79 = arith.constant 8 : i32
    %c0_80 = arith.constant 0 : index
    %c0_81 = arith.constant 0 : index
    %310 = vector.load %arg14[%c0_80, %c0_81] : memref<8x128xf32, #tpu.memory_space<vmem>>, vector<8x128xf32>
    tpu.vector_store %arg14[%c0_80, %c0_81], %304 {strides = array<i32>} : memref<8x128xf32, #tpu.memory_space<vmem>>, vector<8x128xf32>,
    %c0_82 = arith.constant 0 : index
    %c0_83 = arith.constant 0 : index
    %311 = vector.load %arg15[%c0_82, %c0_83] : memref<8x128xf32, #tpu.memory_space<vmem>>, vector<8x128xf32>
    tpu.vector_store %arg15[%c0_82, %c0_83], %302 {strides = array<i32>} : memref<8x128xf32, #tpu.memory_space<vmem>>, vector<8x128xf32>,
    %c0_i32_84 = arith.constant 0 : i32
    %312 = arith.cmpi eq, %arg1, %c0_i32_84 : i32
    %313 = arith.extui %312 : i1 to i32
    %c0_i32_85 = arith.constant 0 : i32
    %314 = arith.cmpi ne, %313, %c0_i32_85 : i32
    scf.if %314 {
      %c0_86 = arith.constant 0 : index
      %c0_87 = arith.constant 0 : index
      %315 = vector.load %arg9[%c0_86, %c0_87] : memref<8x128xf32, #tpu.memory_space<vmem>>, vector<8x128xf32>
      tpu.vector_store %arg9[%c0_86, %c0_87], %304 {strides = array<i32>} : memref<8x128xf32, #tpu.memory_space<vmem>>, vector<8x128xf32>,
      %c0_88 = arith.constant 0 : index
      %c0_89 = arith.constant 0 : index
      %316 = vector.load %arg10[%c0_88, %c0_89] : memref<8x128xf32, #tpu.memory_space<vmem>>, vector<8x128xf32>
      tpu.vector_store %arg10[%c0_88, %c0_89], %302 {strides = array<i32>} : memref<8x128xf32, #tpu.memory_space<vmem>>, vector<8x128xf32>,
    } else {
    }
    return
  }
  func.func @transform_0(%arg0: i32, %arg1: i32) -> (i32, i32, i32) {
    %c0_i32 = arith.constant 0 : i32
    %c0_i32_0 = arith.constant 0 : i32
    return %arg1, %arg0, %c0_i32 : i32, i32, i32
  }
  func.func @transform_1(%arg0: i32, %arg1: i32) -> (i32, i32) {
    %c0_i32 = arith.constant 0 : i32
    %c0_i32_0 = arith.constant 0 : i32
    return %arg0, %c0_i32 : i32, i32
  }
  func.func @transform_2(%arg0: i32, %arg1: i32) -> (i32, i32) {
    %c0_i32 = arith.constant 0 : i32
    %c0_i32_0 = arith.constant 0 : i32
    return %arg0, %c0_i32 : i32, i32
  }
  func.func @transform_3(%arg0: i32, %arg1: i32) -> (i32, i32) {
    %c0_i32 = arith.constant 0 : i32
    %c0_i32_0 = arith.constant 0 : i32
    %c0_i32_1 = arith.constant 0 : i32
    return %c0_i32, %c0_i32_0 : i32, i32
  }
  func.func @transform_6(%arg0: i32, %arg1: i32) -> (i32, i32, i32) {
    %c0_i32 = arith.constant 0 : i32
    %c0_i32_0 = arith.constant 0 : i32
    return %arg1, %arg0, %c0_i32 : i32, i32, i32
  }
  func.func @transform_7(%arg0: i32, %arg1: i32) -> (i32, i32) {
    %c0_i32 = arith.constant 0 : i32
    %c0_i32_0 = arith.constant 0 : i32
    return %arg0, %c0_i32 : i32, i32
  }
  func.func @transform_8(%arg0: i32, %arg1: i32) -> (i32, i32) {
    %c0_i32 = arith.constant 0 : i32
    %c0_i32_0 = arith.constant 0 : i32
    return %arg0, %c0_i32 : i32, i32
  }
}

</mosaic_0001>

<llo_original>
// kernel: tpu_custom_call.1
$region0: #{tpu_custom_call.1}
  #allocation0 [shape = 'u32[]', space=smem, size = 0x4, offset = 0x4, fixed_abs, tag = 'smem constant byte address 0x4 - core index']
  #allocation1 [shape = 'u32[144,128]{1,0:T(1,128)}', space=vmem, size = 0x12000, scoped, tag = 'internal scratch']
  #allocation2 [shape = 'bf16[128,512]{1,0:T(16,128)(2,1)}', space=vmem, size = 0x20000, scoped, tag = 'scratch operand']
  #allocation3 [shape = 'bf16[128,512]{1,0:T(16,128)(2,1)}', space=vmem, size = 0x20000, scoped, tag = 'scratch operand']
  #allocation4 [shape = 'f32[64,512]{1,0:T(8,128)}', space=vmem, size = 0x20000, scoped, tag = 'scratch operand']
  #allocation5 [shape = 'f32[8,128]{1,0:T(8,128)}', space=vmem, size = 0x1000, scoped, tag = 'scratch operand']
  #allocation6 [shape = 'f32[8,128]{1,0:T(8,128)}', space=vmem, size = 0x1000, scoped, tag = 'scratch operand']
  #allocation7 [shape = 's32[2]{0}', space=sflag, size = 0x8, scoped, tag = 'scratch operand']
  #allocation18 [shape = 's32[]', space=sflag, size = 0x4, offset = 0, fixed_abs, tag = 'sflag constant byte address 0x0 - dummy sync flag']
  #allocation20 [shape = 's32[]', space=sflag, size = 0x4, offset = 0, fixed_abs, tag = 'sflag constant byte address 0x0 - dummy sync flag']
  %s0 = inlined_call_operand.hbm [shape: bf16[8,8,128], index: 0, kind: input, shape index: {}]
  %s1 = inlined_call_operand.hbm [shape: f32[8,128], index: 1, kind: input, shape index: {}]
  %s2 = inlined_call_operand.hbm [shape: f32[8,128], index: 2, kind: input, shape index: {}]
  %s3 = inlined_call_operand.vmem [shape: f32[1,512], index: 3, kind: input, shape index: {}]
  %s4 = inlined_call_operand.hbm [shape: bf16[128,512], index: 4, kind: input, shape index: {}]
  %s5 = inlined_call_operand.hbm [shape: bf16[128,512], index: 5, kind: input, shape index: {}]
  %s6 = inlined_call_operand.hbm [shape: bf16[8,8,128], index: 6, kind: output, shape index: {0}]
  %s7 = inlined_call_operand.hbm [shape: f32[8,128], index: 7, kind: output, shape index: {1}]
  %s8 = inlined_call_operand.hbm [shape: f32[8,128], index: 8, kind: output, shape index: {2}]
  %9 = xla_tuple %s6, %s7, %s8
  %s10 = sld [smem:[#allocation0]]
  $region62: #{tpu_custom_call.1} parent=0
    _
  %s12 = ssub.s32 1, %s10
  %s13 = scalar_select 0, %s12, %s10
  $region1: #{tpu_custom_call.1} parent=0
    #allocation8 [shape = 'u8[16384]{0}', space=vmem, size = 0x4000, scoped, tag = 'input window, operand 0, single buffered']
    #allocation9 [shape = 's32[1]{0}', space=sflag, size = 0x4, scoped, tag = 'scoped memory for tpu_custom_call.1']
    #allocation10 [shape = 's32[1]{0}', space=sflag, size = 0x4, scoped, tag = 'scoped memory for tpu_custom_call.1']
    #allocation11 [shape = 'u8[4096]{0}', space=vmem, size = 0x1000, scoped, tag = 'input window, operand 1, single buffered']
    #allocation12 [shape = 's32[1]{0}', space=sflag, size = 0x4, scoped, tag = 'scoped memory for tpu_custom_call.1']
    #allocation13 [shape = 'u8[4096]{0}', space=vmem, size = 0x1000, scoped, tag = 'input window, operand 2, single buffered']
    #allocation14 [shape = 'u8[16384]{0}', space=vmem, size = 0x4000, scoped, tag = 'output window, operand 0, single buffered']
    #allocation15 [shape = 'u8[4096]{0}', space=vmem, size = 0x1000, scoped, tag = 'output window, operand 1, single buffered']
    #allocation16 [shape = 's32[1]{0}', space=sflag, size = 0x4, scoped, tag = 'scoped memory for tpu_custom_call.1']
    #allocation17 [shape = 'u8[4096]{0}', space=vmem, size = 0x1000, scoped, tag = 'output window, operand 2, single buffered']
    %14 = vsyncpa [#allocation9], 0
    %15 = vsyncpa [#allocation12], 0
    %16 = vsyncpa [#allocation10], 0
    %17 = vsyncpa [#allocation16], 0
    // Predicated region
    $region2: #{tpu_custom_call.1} parent=1 // pred_check
      _
    $region3: #{tpu_custom_call.1} parent=1 // pred_check_branch
      %19 = sbr.rel (0) target = $region5
    $region4: #{tpu_custom_call.1} parent=1 // pred_region
      %s21 = ssub.s32 512, 512
      %22 = vsyncadd [#allocation9], %s21
      %s23 = sshll.u32 [#allocation8], 4
      %s24 = int_to_ptr.vmem [resolvable:$true] %s23
      %29 = dma.hbm_to_vmem [thread:$0]  %s0, 512, %s24, [#allocation9], 64, 64, 4
    $region5: #{tpu_custom_call.1} parent=1 // pred_fallthru
      _
    // Predicated region
    $region6: #{tpu_custom_call.1} parent=1 // pred_check
      _
    $region7: #{tpu_custom_call.1} parent=1 // pred_check_branch
      %31 = sbr.rel (0) target = $region9
    $region8: #{tpu_custom_call.1} parent=1 // pred_region
      %s33 = ssub.s32 128, 128
      %34 = vsyncadd [#allocation12], %s33
      %s36 = sshll.u32 [#allocation11], 4
      %s37 = int_to_ptr.vmem [resolvable:$true] %s36
      %39 = dma.hbm_to_vmem [thread:$0]  %s1, 128, %s37, [#allocation12]
    $region9: #{tpu_custom_call.1} parent=1 // pred_fallthru
      _
    // Predicated region
    $region10: #{tpu_custom_call.1} parent=1 // pred_check
      _
    $region11: #{tpu_custom_call.1} parent=1 // pred_check_branch
      %41 = sbr.rel (0) target = $region13
    $region12: #{tpu_custom_call.1} parent=1 // pred_region
      %s43 = ssub.s32 128, 128
      %44 = vsyncadd [#allocation12], %s43
      %s46 = sshll.u32 [#allocation13], 4
      %s47 = int_to_ptr.vmem [resolvable:$true] %s46
      %49 = dma.hbm_to_vmem [thread:$0]  %s2, 128, %s47, [#allocation12]
    $region13: #{tpu_custom_call.1} parent=1 // pred_fallthru
      _
    // Predicated region
    $region14: #{tpu_custom_call.1} parent=1 // pred_check
      _
    $region15: #{tpu_custom_call.1} parent=1 // pred_check_branch
      %51 = sbr.rel (0) target = $region17
    $region16: #{tpu_custom_call.1} parent=1 // pred_region
      _
    $region17: #{tpu_custom_call.1} parent=1 // pred_fallthru
      _
    // Predicated region
    $region18: #{tpu_custom_call.1} parent=1 // pred_check
      _
    $region19: #{tpu_custom_call.1} parent=1 // pred_check_branch
      %53 = sbr.rel (0) target = $region21
    $region20: #{tpu_custom_call.1} parent=1 // pred_region
      %54 = dma.done [#allocation9], 512
    $region21: #{tpu_custom_call.1} parent=1 // pred_fallthru
      _
    // Predicated region
    $region22: #{tpu_custom_call.1} parent=1 // pred_check
      _
    $region23: #{tpu_custom_call.1} parent=1 // pred_check_branch
      %56 = sbr.rel (0) target = $region25
    $region24: #{tpu_custom_call.1} parent=1 // pred_region
      %57 = dma.done [#allocation12], 128
    $region25: #{tpu_custom_call.1} parent=1 // pred_fallthru
      _
    // Predicated region
    $region26: #{tpu_custom_call.1} parent=1 // pred_check
      _
    $region27: #{tpu_custom_call.1} parent=1 // pred_check_branch
      %59 = sbr.rel (0) target = $region29
    $region28: #{tpu_custom_call.1} parent=1 // pred_region
      %60 = dma.done [#allocation12], 128
    $region29: #{tpu_custom_call.1} parent=1 // pred_fallthru
      _
    %p62 = scmp.eq.s32.totalorder 0, 0
    // Predicated region
    $region30: #{tpu_custom_call.1} parent=1 // pred_check
      %p63 = pneg %p62
    $region31: #{tpu_custom_call.1} parent=1 // pred_check_branch
      %65 = sbr.rel (%p63) target = $region33
    $region32: #{tpu_custom_call.1} parent=1 // pred_region
      #allocation19 [shape = 'u32[9]{0}', space=smem, size = 0x24, scoped, tag = 'DMA stride descriptor']
      #allocation21 [shape = 'u32[9]{0}', space=smem, size = 0x24, scoped, tag = 'DMA stride descriptor']
      %s67 = sshll.u32 1, 14
      %s68 = sxor.u32 4294967295, %s67
      %s70 = sld [smem:[#allocation0]]
      %s71 = sadd.s32 2, %s70
      %s73 = sshll.u32 7, 26
      %s74 = sxor.u32 4294967295, %s73
      %s75 = sand.u32 0, %s74
      %s76 = sshll.u32 %s71, 26
      %s77 = sor.u32 %s75, %s76
      %s78 = sshll.u32 [#allocation2], 4
      %s79 = int_to_ptr.vmem [resolvable:$true] %s78
      %82 = sst [smem:[#allocation19]] 512
      %s83 = scalar_lea.smem [#allocation19], 1
      %84 = sst [smem:[%s83]] 512
      %s85 = scalar_lea.smem [#allocation19], 2
      %86 = sst [smem:[%s85]] 4
      %s87 = scalar_lea.smem [#allocation19], 3
      %88 = sst [smem:[%s87]] 64
      %s89 = scalar_lea.smem [#allocation19], 4
      %90 = sst [smem:[%s89]] 128
      %s91 = scalar_lea.smem [#allocation19], 5
      %92 = sst [smem:[%s91]] 2
      %s93 = scalar_lea.smem [#allocation19], 6
      %94 = sst [smem:[%s93]] 256
      %s95 = scalar_lea.smem [#allocation19], 7
      %96 = sst [smem:[%s95]] 64
      %s97 = scalar_lea.smem [#allocation19], 8
      %98 = sst [smem:[%s97]] 4
      %100 = dma.general %s4, 4096, %s79, [#allocation7], [#allocation18], [#allocation19], %s77, 0
      %s101 = scalar_lea.sflag [#allocation7], 1
      %s103 = sshll.u32 1, 14
      %s104 = sxor.u32 4294967295, %s103
      %s106 = sadd.s32 2, %s70
      %s108 = sshll.u32 7, 26
      %s109 = sxor.u32 4294967295, %s108
      %s110 = sand.u32 0, %s109
      %s111 = sshll.u32 %s106, 26
      %s112 = sor.u32 %s110, %s111
      %s113 = sshll.u32 [#allocation3], 4
      %s114 = int_to_ptr.vmem [resolvable:$true] %s113
      %117 = sst [smem:[#allocation21]] 512
      %s118 = scalar_lea.smem [#allocation21], 1
      %119 = sst [smem:[%s118]] 512
      %s120 = scalar_lea.smem [#allocation21], 2
      %121 = sst [smem:[%s120]] 4
      %s122 = scalar_lea.smem [#allocation21], 3
      %123 = sst [smem:[%s122]] 64
      %s124 = scalar_lea.smem [#allocation21], 4
      %125 = sst [smem:[%s124]] 128
      %s126 = scalar_lea.smem [#allocation21], 5
      %127 = sst [smem:[%s126]] 2
      %s128 = scalar_lea.smem [#allocation21], 6
      %129 = sst [smem:[%s128]] 256
      %s130 = scalar_lea.smem [#allocation21], 7
      %131 = sst [smem:[%s130]] 64
      %s132 = scalar_lea.smem [#allocation21], 8
      %133 = sst [smem:[%s132]] 4
      %135 = dma.general %s5, 4096, %s114, %s101, [#allocation20], [#allocation21], %s112, 0
      %s136 = smul.u32 4, 16
      %s137 = smul.u32 %s136, 4
      %s138 = sshll.u32 %s137, 4
      %139 = dma.done [#allocation7], %s138
      %s140 = sshll.u32 %s137, 4
      %141 = dma.done %s101, %s140
      %v142 = vld [vmem:[#allocation11] sm:$0xff]
      %143 = vst [vmem:[#allocation5] sm:$0xff] %v142
      %v144 = vld [vmem:[#allocation13] sm:$0xff]
      %145 = vst [vmem:[#allocation6] sm:$0xff] %v144
    $region33: #{tpu_custom_call.1} parent=1 // pred_fallthru
      _
    %v146 = vld [vmem:[#allocation8] sm:$0xf]
    %v147 = vld [vmem:[#allocation8 + $0x4] sm:$0xf]
    %v148 = vld [vmem:[#allocation8 + $0x8] sm:$0xf]
    %v149 = vld [vmem:[#allocation8 + $0xc] sm:$0xf]
    %v150 = vld [vmem:[#allocation8 + $0x10] sm:$0xf]
    %v151 = vld [vmem:[#allocation8 + $0x14] sm:$0xf]
    %v152 = vld [vmem:[#allocation8 + $0x18] sm:$0xf]
    %v153 = vld [vmem:[#allocation8 + $0x1c] sm:$0xf]
    %v154 = vld [vmem:[#allocation2] sm:$0xff]
    %v155 = vld [vmem:[#allocation2 + $0x8] sm:$0xff]
    %v156 = vld [vmem:[#allocation2 + $0x10] sm:$0xff]
    %v157 = vld [vmem:[#allocation2 + $0x18] sm:$0xff]
    %v158 = vld [vmem:[#allocation2 + $0x20] sm:$0xff]
    %v159 = vld [vmem:[#allocation2 + $0x28] sm:$0xff]
    %v160 = vld [vmem:[#allocation2 + $0x30] sm:$0xff]
    %v161 = vld [vmem:[#allocation2 + $0x38] sm:$0xff]
    %v162 = vld [vmem:[#allocation2 + $0x40] sm:$0xff]
    %v163 = vld [vmem:[#allocation2 + $0x48] sm:$0xff]
    %v164 = vld [vmem:[#allocation2 + $0x50] sm:$0xff]
    %v165 = vld [vmem:[#allocation2 + $0x58] sm:$0xff]
    %v166 = vld [vmem:[#allocation2 + $0x60] sm:$0xff]
    %v167 = vld [vmem:[#allocation2 + $0x68] sm:$0xff]
    %v168 = vld [vmem:[#allocation2 + $0x70] sm:$0xff]
    %v169 = vld [vmem:[#allocation2 + $0x78] sm:$0xff]
    %v170 = vld [vmem:[#allocation2 + $0x80] sm:$0xff]
    %v171 = vld [vmem:[#allocation2 + $0x88] sm:$0xff]
    %v172 = vld [vmem:[#allocation2 + $0x90] sm:$0xff]
    %v173 = vld [vmem:[#allocation2 + $0x98] sm:$0xff]
    %v174 = vld [vmem:[#allocation2 + $0xa0] sm:$0xff]
    %v175 = vld [vmem:[#allocation2 + $0xa8] sm:$0xff]
    %v176 = vld [vmem:[#allocation2 + $0xb0] sm:$0xff]
    %v177 = vld [vmem:[#allocation2 + $0xb8] sm:$0xff]
    %v178 = vld [vmem:[#allocation2 + $0xc0] sm:$0xff]
    %v179 = vld [vmem:[#allocation2 + $0xc8] sm:$0xff]
    %v180 = vld [vmem:[#allocation2 + $0xd0] sm:$0xff]
    %v181 = vld [vmem:[#allocation2 + $0xd8] sm:$0xff]
    %v182 = vld [vmem:[#allocation2 + $0xe0] sm:$0xff]
    %v183 = vld [vmem:[#allocation2 + $0xe8] sm:$0xff]
    %v184 = vld [vmem:[#allocation2 + $0xf0] sm:$0xff]
    %v185 = vld [vmem:[#allocation2 + $0xf8] sm:$0xff]
    %v186 = vld [vmem:[%s3] sm:$0xf]
    %v188 = vlaneseq
    %v189 = vshrl.u32 %v188, 7
    %v190 = vsub.s32 0, %v189
    %v191 = vrot.slane %v186, %v190
    %v192 = vlaneseq
    %v193 = vshrl.u32 %v192, 7
    %v194 = vsub.s32 1, %v193
    %v195 = vrot.slane %v186, %v194
    %v196 = vlaneseq
    %v197 = vshrl.u32 %v196, 7
    %v198 = vsub.s32 2, %v197
    %v199 = vrot.slane %v186, %v198
    %v200 = vlaneseq
    %v201 = vshrl.u32 %v200, 7
    %v202 = vsub.s32 3, %v201
    %v203 = vrot.slane %v186, %v202
    %v216 = vunpack.c.l.b16 %v146
    %v217 = vunpack.c.l.b16 %v147
    %v218 = vunpack.c.l.b16 %v148
    %v219 = vunpack.c.l.b16 %v149
    %v220 = vunpack.c.l.b16 %v150
    %v221 = vunpack.c.l.b16 %v151
    %v222 = vunpack.c.l.b16 %v152
    %v223 = vunpack.c.l.b16 %v153
    %v224 = vpack.c.b16 %v217, %v216
    %v225 = vpack.c.b16 %v219, %v218
    %v226 = vpack.c.b16 %v221, %v220
    %v227 = vpack.c.b16 %v223, %v222
    %232 = vmatprep.subr.bf16.mxu0 %v155
    %233 = vmatpush1.bf16.msra.mxu0 %v154
    %234 = vmatprep.subr.bf16.mxu0 %v159
    %235 = vmatpush1.bf16.msra.mxu0 %v158
    %236 = vmatprep.subr.bf16.mxu0 %v163
    %237 = vmatpush1.bf16.msra.mxu0 %v162
    %238 = vmatprep.subr.bf16.mxu0 %v167
    %239 = vmatpush1.bf16.msra.mxu0 %v166
    %240 = vmatprep.subr.bf16.mxu0 %v171
    %241 = vmatpush1.bf16.msra.mxu0 %v170
    %242 = vmatprep.subr.bf16.mxu0 %v175
    %243 = vmatpush1.bf16.msra.mxu0 %v174
    %244 = vmatprep.subr.bf16.mxu0 %v179
    %245 = vmatpush1.bf16.msra.mxu0 %v178
    %246 = vmatprep.subr.bf16.mxu0 %v183
    %247 = vmatpush1.bf16.msra.mxu0 %v182
    %248 = vmatprep.subr.bf16.mxu0 0
    %249 = vmatpush1.bf16.msra.mxu0 0
    %250 = vmatprep.subr.bf16.mxu0 0
    %251 = vmatpush1.bf16.msra.mxu0 0
    %252 = vmatprep.subr.bf16.mxu0 0
    %253 = vmatpush1.bf16.msra.mxu0 0
    %254 = vmatprep.subr.bf16.mxu0 0
    %255 = vmatpush1.bf16.msra.mxu0 0
    %256 = vmatprep.subr.bf16.mxu0 0
    %257 = vmatpush1.bf16.msra.mxu0 0
    %258 = vmatprep.subr.bf16.mxu0 0
    %259 = vmatpush1.bf16.msra.mxu0 0
    %260 = vmatprep.subr.bf16.mxu0 0
    %261 = vmatpush1.bf16.msra.mxu0 0
    %262 = vmatprep.subr.bf16.mxu0 0
    %263 = vmatpush1.bf16.msra.mxu0 0
    %264 = vmatprep.mubr.bf16.mxu0 0
    %265 = vmatmul.mubr.bf16.gmra.mrb[0].mxu0 %v224
    %v266 = vpop.f32.mrb[0].mxu0
    %v267 = vadd.f32 %v191, %v266
    %v268 = vpop.f32.mrb[0].mxu0
    %v269 = vadd.f32 %v195, %v268
    %v270 = vpop.f32.mrb[0].mxu0
    %v271 = vadd.f32 %v191, %v270
    %v272 = vpop.f32.mrb[0].mxu0
    %v273 = vadd.f32 %v195, %v272
    %274 = vmatprep.mubr.bf16.mxu0 0
    %275 = vmatmul.mubr.bf16.gmra.mrb[0].mxu0 %v225
    %v276 = vpop.f32.mrb[0].mxu0
    %v277 = vadd.f32 %v191, %v276
    %v278 = vpop.f32.mrb[0].mxu0
    %v279 = vadd.f32 %v195, %v278
    %v280 = vpop.f32.mrb[0].mxu0
    %v281 = vadd.f32 %v191, %v280
    %v282 = vpop.f32.mrb[0].mxu0
    %v283 = vadd.f32 %v195, %v282
    %284 = vmatprep.mubr.bf16.mxu0 0
    %285 = vmatmul.mubr.bf16.gmra.mrb[0].mxu0 %v226
    %v286 = vpop.f32.mrb[0].mxu0
    %v287 = vadd.f32 %v191, %v286
    %v288 = vpop.f32.mrb[0].mxu0
    %v289 = vadd.f32 %v195, %v288
    %v290 = vpop.f32.mrb[0].mxu0
    %v291 = vadd.f32 %v191, %v290
    %v292 = vpop.f32.mrb[0].mxu0
    %v293 = vadd.f32 %v195, %v292
    %294 = vmatprep.mubr.bf16.mxu0 0
    %295 = vmatmul.mubr.bf16.gmra.mrb[0].mxu0 %v227
    %v296 = vpop.f32.mrb[0].mxu0
    %v297 = vadd.f32 %v191, %v296
    %v298 = vpop.f32.mrb[0].mxu0
    %v299 = vadd.f32 %v195, %v298
    %v300 = vpop.f32.mrb[0].mxu0
    %v301 = vadd.f32 %v191, %v300
    %v302 = vpop.f32.mrb[0].mxu0
    %v303 = vadd.f32 %v195, %v302
    %304 = vdwg.mxu0
    %305 = vmatprep.subr.bf16.mxu0 %v157
    %306 = vmatpush1.bf16.msra.mxu0 %v156
    %307 = vmatprep.subr.bf16.mxu0 %v161
    %308 = vmatpush1.bf16.msra.mxu0 %v160
    %309 = vmatprep.subr.bf16.mxu0 %v165
    %310 = vmatpush1.bf16.msra.mxu0 %v164
    %311 = vmatprep.subr.bf16.mxu0 %v169
    %312 = vmatpush1.bf16.msra.mxu0 %v168
    %313 = vmatprep.subr.bf16.mxu0 %v173
    %314 = vmatpush1.bf16.msra.mxu0 %v172
    %315 = vmatprep.subr.bf16.mxu0 %v177
    %316 = vmatpush1.bf16.msra.mxu0 %v176
    %317 = vmatprep.subr.bf16.mxu0 %v181
    %318 = vmatpush1.bf16.msra.mxu0 %v180
    %319 = vmatprep.subr.bf16.mxu0 %v185
    %320 = vmatpush1.bf16.msra.mxu0 %v184
    %321 = vmatprep.subr.bf16.mxu0 0
    %322 = vmatpush1.bf16.msra.mxu0 0
    %323 = vmatprep.subr.bf16.mxu0 0
    %324 = vmatpush1.bf16.msra.mxu0 0
    %325 = vmatprep.subr.bf16.mxu0 0
    %326 = vmatpush1.bf16.msra.mxu0 0
    %327 = vmatprep.subr.bf16.mxu0 0
    %328 = vmatpush1.bf16.msra.mxu0 0
    %329 = vmatprep.subr.bf16.mxu0 0
    %330 = vmatpush1.bf16.msra.mxu0 0
    %331 = vmatprep.subr.bf16.mxu0 0
    %332 = vmatpush1.bf16.msra.mxu0 0
    %333 = vmatprep.subr.bf16.mxu0 0
    %334 = vmatpush1.bf16.msra.mxu0 0
    %335 = vmatprep.subr.bf16.mxu0 0
    %336 = vmatpush1.bf16.msra.mxu0 0
    %337 = vmatprep.mubr.bf16.mxu0 0
    %338 = vmatmul.mubr.bf16.gmra.mrb[0].mxu0 %v224
    %v339 = vpop.f32.mrb[0].mxu0
    %v340 = vadd.f32 %v199, %v339
    %v341 = vpop.f32.mrb[0].mxu0
    %v342 = vadd.f32 %v203, %v341
    %v343 = vpop.f32.mrb[0].mxu0
    %v344 = vadd.f32 %v199, %v343
    %v345 = vpop.f32.mrb[0].mxu0
    %v346 = vadd.f32 %v203, %v345
    %347 = vmatprep.mubr.bf16.mxu0 0
    %348 = vmatmul.mubr.bf16.gmra.mrb[0].mxu0 %v225
    %v349 = vpop.f32.mrb[0].mxu0
    %v350 = vadd.f32 %v199, %v349
    %v351 = vpop.f32.mrb[0].mxu0
    %v352 = vadd.f32 %v203, %v351
    %v353 = vpop.f32.mrb[0].mxu0
    %v354 = vadd.f32 %v199, %v353
    %v355 = vpop.f32.mrb[0].mxu0
    %v356 = vadd.f32 %v203, %v355
    %357 = vmatprep.mubr.bf16.mxu0 0
    %358 = vmatmul.mubr.bf16.gmra.mrb[0].mxu0 %v226
    %v359 = vpop.f32.mrb[0].mxu0
    %v360 = vadd.f32 %v199, %v359
    %v361 = vpop.f32.mrb[0].mxu0
    %v362 = vadd.f32 %v203, %v361
    %v363 = vpop.f32.mrb[0].mxu0
    %v364 = vadd.f32 %v199, %v363
    %v365 = vpop.f32.mrb[0].mxu0
    %v366 = vadd.f32 %v203, %v365
    %367 = vmatprep.mubr.bf16.mxu0 0
    %368 = vmatmul.mubr.bf16.gmra.mrb[0].mxu0 %v227
    %v369 = vpop.f32.mrb[0].mxu0
    %v370 = vadd.f32 %v199, %v369
    %v371 = vpop.f32.mrb[0].mxu0
    %v372 = vadd.f32 %v203, %v371
    %v373 = vpop.f32.mrb[0].mxu0
    %v374 = vadd.f32 %v199, %v373
    %v375 = vpop.f32.mrb[0].mxu0
    %v376 = vadd.f32 %v203, %v375
    %377 = vdwg.mxu0
    %378 = vst [vmem:[#allocation4] sm:$0xff] %v267
    %379 = vst [vmem:[#allocation4 + $0x8] sm:$0xff] %v269
    %380 = vst [vmem:[#allocation4 + $0x10] sm:$0xff] %v340
    %381 = vst [vmem:[#allocation4 + $0x18] sm:$0xff] %v342
    %382 = vst [vmem:[#allocation4 + $0x20] sm:$0xff] %v271
    %383 = vst [vmem:[#allocation4 + $0x28] sm:$0xff] %v273
    %384 = vst [vmem:[#allocation4 + $0x30] sm:$0xff] %v344
    %385 = vst [vmem:[#allocation4 + $0x38] sm:$0xff] %v346
    %386 = vst [vmem:[#allocation4 + $0x40] sm:$0xff] %v277
    %387 = vst [vmem:[#allocation4 + $0x48] sm:$0xff] %v279
    %388 = vst [vmem:[#allocation4 + $0x50] sm:$0xff] %v350
    %389 = vst [vmem:[#allocation4 + $0x58] sm:$0xff] %v352
    %390 = vst [vmem:[#allocation4 + $0x60] sm:$0xff] %v281
    %391 = vst [vmem:[#allocation4 + $0x68] sm:$0xff] %v283
    %392 = vst [vmem:[#allocation4 + $0x70] sm:$0xff] %v354
    %393 = vst [vmem:[#allocation4 + $0x78] sm:$0xff] %v356
    %394 = vst [vmem:[#allocation4 + $0x80] sm:$0xff] %v287
    %395 = vst [vmem:[#allocation4 + $0x88] sm:$0xff] %v289
    %396 = vst [vmem:[#allocation4 + $0x90] sm:$0xff] %v360
    %397 = vst [vmem:[#allocation4 + $0x98] sm:$0xff] %v362
    %398 = vst [vmem:[#allocation4 + $0xa0] sm:$0xff] %v291
    %399 = vst [vmem:[#allocation4 + $0xa8] sm:$0xff] %v293
    %400 = vst [vmem:[#allocation4 + $0xb0] sm:$0xff] %v364
    %401 = vst [vmem:[#allocation4 + $0xb8] sm:$0xff] %v366
    %402 = vst [vmem:[#allocation4 + $0xc0] sm:$0xff] %v297
    %403 = vst [vmem:[#allocation4 + $0xc8] sm:$0xff] %v299
    %404 = vst [vmem:[#allocation4 + $0xd0] sm:$0xff] %v370
    %405 = vst [vmem:[#allocation4 + $0xd8] sm:$0xff] %v372
    %406 = vst [vmem:[#allocation4 + $0xe0] sm:$0xff] %v301
    %407 = vst [vmem:[#allocation4 + $0xe8] sm:$0xff] %v303
    %408 = vst [vmem:[#allocation4 + $0xf0] sm:$0xff] %v374
    %409 = vst [vmem:[#allocation4 + $0xf8] sm:$0xff] %v376
    %v410 = vld [vmem:[#allocation3] sm:$0xff]
    %v411 = vld [vmem:[#allocation3 + $0x8] sm:$0xff]
    %v412 = vld [vmem:[#allocation3 + $0x10] sm:$0xff]
    %v413 = vld [vmem:[#allocation3 + $0x18] sm:$0xff]
    %v414 = vld [vmem:[#allocation3 + $0x20] sm:$0xff]
    %v415 = vld [vmem:[#allocation3 + $0x28] sm:$0xff]
    %v416 = vld [vmem:[#allocation3 + $0x30] sm:$0xff]
    %v417 = vld [vmem:[#allocation3 + $0x38] sm:$0xff]
    %v418 = vld [vmem:[#allocation3 + $0x40] sm:$0xff]
    %v419 = vld [vmem:[#allocation3 + $0x48] sm:$0xff]
    %v420 = vld [vmem:[#allocation3 + $0x50] sm:$0xff]
    %v421 = vld [vmem:[#allocation3 + $0x58] sm:$0xff]
    %v422 = vld [vmem:[#allocation3 + $0x60] sm:$0xff]
    %v423 = vld [vmem:[#allocation3 + $0x68] sm:$0xff]
    %v424 = vld [vmem:[#allocation3 + $0x70] sm:$0xff]
    %v425 = vld [vmem:[#allocation3 + $0x78] sm:$0xff]
    %v426 = vld [vmem:[#allocation3 + $0x80] sm:$0xff]
    %v427 = vld [vmem:[#allocation3 + $0x88] sm:$0xff]
    %v428 = vld [vmem:[#allocation3 + $0x90] sm:$0xff]
    %v429 = vld [vmem:[#allocation3 + $0x98] sm:$0xff]
    %v430 = vld [vmem:[#allocation3 + $0xa0] sm:$0xff]
    %v431 = vld [vmem:[#allocation3 + $0xa8] sm:$0xff]
    %v432 = vld [vmem:[#allocation3 + $0xb0] sm:$0xff]
    %v433 = vld [vmem:[#allocation3 + $0xb8] sm:$0xff]
    %v434 = vld [vmem:[#allocation3 + $0xc0] sm:$0xff]
    %v435 = vld [vmem:[#allocation3 + $0xc8] sm:$0xff]
    %v436 = vld [vmem:[#allocation3 + $0xd0] sm:$0xff]
    %v437 = vld [vmem:[#allocation3 + $0xd8] sm:$0xff]
    %v438 = vld [vmem:[#allocation3 + $0xe0] sm:$0xff]
    %v439 = vld [vmem:[#allocation3 + $0xe8] sm:$0xff]
    %v440 = vld [vmem:[#allocation3 + $0xf0] sm:$0xff]
    %v441 = vld [vmem:[#allocation3 + $0xf8] sm:$0xff]
    %v442 = vld [vmem:[#allocation5] sm:$0xff]
    %v443 = vld [vmem:[#allocation6] sm:$0xff]
    %s444 = smul.u32 0, 4
    %s445 = smul.addr %s444, 8
    %s446 = scalar_lea.vmem [#allocation4], %s445
    %v447 = vld [vmem:[%s446] sm:$0xff]
    %v448 = vld [vmem:[%s446 + $0x8] sm:$0xff]
    %v449 = vld [vmem:[%s446 + $0x10] sm:$0xff]
    %v450 = vld [vmem:[%s446 + $0x18] sm:$0xff]
    %v451 = vpack.c.bf16 %v442, %v442
    %452 = vmatprep.subr.bf16.mxu0 %v411
    %453 = vmatpush1.bf16.msra.mxu0 %v410
    %454 = vmatprep.subr.bf16.mxu0 %v415
    %455 = vmatpush1.bf16.msra.mxu0 %v414
    %456 = vmatprep.subr.bf16.mxu0 %v419
    %457 = vmatpush1.bf16.msra.mxu0 %v418
    %458 = vmatprep.subr.bf16.mxu0 %v423
    %459 = vmatpush1.bf16.msra.mxu0 %v422
    %460 = vmatprep.subr.bf16.mxu0 %v427
    %461 = vmatpush1.bf16.msra.mxu0 %v426
    %462 = vmatprep.subr.bf16.mxu0 %v431
    %463 = vmatpush1.bf16.msra.mxu0 %v430
    %464 = vmatprep.subr.bf16.mxu0 %v435
    %465 = vmatpush1.bf16.msra.mxu0 %v434
    %466 = vmatprep.subr.bf16.mxu0 %v439
    %467 = vmatpush1.bf16.msra.mxu0 %v438
    %468 = vmatprep.subr.bf16.mxu0 0
    %469 = vmatpush1.bf16.msra.mxu0 0
    %470 = vmatprep.subr.bf16.mxu0 0
    %471 = vmatpush1.bf16.msra.mxu0 0
    %472 = vmatprep.subr.bf16.mxu0 0
    %473 = vmatpush1.bf16.msra.mxu0 0
    %474 = vmatprep.subr.bf16.mxu0 0
    %475 = vmatpush1.bf16.msra.mxu0 0
    %476 = vmatprep.subr.bf16.mxu0 0
    %477 = vmatpush1.bf16.msra.mxu0 0
    %478 = vmatprep.subr.bf16.mxu0 0
    %479 = vmatpush1.bf16.msra.mxu0 0
    %480 = vmatprep.subr.bf16.mxu0 0
    %481 = vmatpush1.bf16.msra.mxu0 0
    %482 = vmatprep.subr.bf16.mxu0 0
    %483 = vmatpush1.bf16.msra.mxu0 0
    %484 = vmatprep.mubr.bf16.mxu0 0
    %485 = vmatmul.mubr.bf16.gmra.mrb[0].mxu0 %v451
    %v486 = vpop.f32.mrb[0].mxu0
    %v487 = vadd.f32 0.0, %v486
    %v488 = vpop.f32.mrb[0].mxu0
    %v489 = vadd.f32 0.0, %v488
    %v490 = vpop.f32.mrb[0].mxu0
    %v491 = vpop.f32.mrb[0].mxu0
    %492 = vdwg.mxu0
    %493 = vmatprep.subr.bf16.mxu0 %v413
    %494 = vmatpush1.bf16.msra.mxu0 %v412
    %495 = vmatprep.subr.bf16.mxu0 %v417
    %496 = vmatpush1.bf16.msra.mxu0 %v416
    %497 = vmatprep.subr.bf16.mxu0 %v421
    %498 = vmatpush1.bf16.msra.mxu0 %v420
    %499 = vmatprep.subr.bf16.mxu0 %v425
    %500 = vmatpush1.bf16.msra.mxu0 %v424
    %501 = vmatprep.subr.bf16.mxu0 %v429
    %502 = vmatpush1.bf16.msra.mxu0 %v428
    %503 = vmatprep.subr.bf16.mxu0 %v433
    %504 = vmatpush1.bf16.msra.mxu0 %v432
    %505 = vmatprep.subr.bf16.mxu0 %v437
    %506 = vmatpush1.bf16.msra.mxu0 %v436
    %507 = vmatprep.subr.bf16.mxu0 %v441
    %508 = vmatpush1.bf16.msra.mxu0 %v440
    %509 = vmatprep.subr.bf16.mxu0 0
    %510 = vmatpush1.bf16.msra.mxu0 0
    %511 = vmatprep.subr.bf16.mxu0 0
    %512 = vmatpush1.bf16.msra.mxu0 0
    %513 = vmatprep.subr.bf16.mxu0 0
    %514 = vmatpush1.bf16.msra.mxu0 0
    %515 = vmatprep.subr.bf16.mxu0 0
    %516 = vmatpush1.bf16.msra.mxu0 0
    %517 = vmatprep.subr.bf16.mxu0 0
    %518 = vmatpush1.bf16.msra.mxu0 0
    %519 = vmatprep.subr.bf16.mxu0 0
    %520 = vmatpush1.bf16.msra.mxu0 0
    %521 = vmatprep.subr.bf16.mxu0 0
    %522 = vmatpush1.bf16.msra.mxu0 0
    %523 = vmatprep.subr.bf16.mxu0 0
    %524 = vmatpush1.bf16.msra.mxu0 0
    %525 = vmatprep.mubr.bf16.mxu0 0
    %526 = vmatmul.mubr.bf16.gmra.mrb[0].mxu0 %v451
    %v527 = vpop.f32.mrb[0].mxu0
    %v528 = vadd.f32 0.0, %v527
    %v529 = vpop.f32.mrb[0].mxu0
    %v530 = vadd.f32 0.0, %v529
    %v531 = vpop.f32.mrb[0].mxu0
    %v532 = vpop.f32.mrb[0].mxu0
    %533 = vdwg.mxu0
    %v534 = vadd.f32 %v447, %v487
    %v535 = vadd.f32 %v448, %v489
    %v536 = vadd.f32 %v449, %v528
    %v537 = vadd.f32 %v450, %v530
    %v538 = vxor.u32 %v534, 2147483648
    %v539 = vmul.f32 %v538, 1.442695
    %v540 = vpow.pop %v539
    %v541 = vadd.f32 %v540, 1.0
    %v542 = vrcp.pop %v541
    %v543 = vmul.f32 1.0, %v542
    %v544 = vxor.u32 %v535, 2147483648
    %v545 = vmul.f32 %v544, 1.442695
    %v546 = vpow.pop %v545
    %v547 = vadd.f32 %v546, 1.0
    %v548 = vrcp.pop %v547
    %v549 = vmul.f32 1.0, %v548
    %v550 = vtanh.pop %v536
    %v551 = vxor.u32 %v537, 2147483648
    %v552 = vmul.f32 %v551, 1.442695
    %v553 = vpow.pop %v552
    %v554 = vadd.f32 %v553, 1.0
    %v555 = vrcp.pop %v554
    %v556 = vmul.f32 1.0, %v555
    %v557 = vmul.f32 %v549, %v443
    %v558 = vmul.f32 %v543, %v550
    %v559 = vadd.f32 %v557, %v558
    %v560 = vtanh.pop %v559
    %v561 = vmul.f32 %v556, %v560
    %v562 = vpack.c.bf16 %v561, %v561
    %563 = vst [vmem:[#allocation14] sm:$0xf] %v562
    %s564 = smul.u32 1, 4
    %s565 = smul.addr %s564, 8
    %s566 = scalar_lea.vmem [#allocation4], %s565
    %v567 = vld [vmem:[%s566] sm:$0xff]
    %v568 = vld [vmem:[%s566 + $0x8] sm:$0xff]
    %v569 = vld [vmem:[%s566 + $0x10] sm:$0xff]
    %v570 = vld [vmem:[%s566 + $0x18] sm:$0xff]
    %571 = vmatprep.subr.bf16.mxu0 %v411
    %572 = vmatpush1.bf16.msra.mxu0 %v410
    %573 = vmatprep.subr.bf16.mxu0 %v415
    %574 = vmatpush1.bf16.msra.mxu0 %v414
    %575 = vmatprep.subr.bf16.mxu0 %v419
    %576 = vmatpush1.bf16.msra.mxu0 %v418
    %577 = vmatprep.subr.bf16.mxu0 %v423
    %578 = vmatpush1.bf16.msra.mxu0 %v422
    %579 = vmatprep.subr.bf16.mxu0 %v427
    %580 = vmatpush1.bf16.msra.mxu0 %v426
    %581 = vmatprep.subr.bf16.mxu0 %v431
    %582 = vmatpush1.bf16.msra.mxu0 %v430
    %583 = vmatprep.subr.bf16.mxu0 %v435
    %584 = vmatpush1.bf16.msra.mxu0 %v434
    %585 = vmatprep.subr.bf16.mxu0 %v439
    %586 = vmatpush1.bf16.msra.mxu0 %v438
    %587 = vmatprep.subr.bf16.mxu0 0
    %588 = vmatpush1.bf16.msra.mxu0 0
    %589 = vmatprep.subr.bf16.mxu0 0
    %590 = vmatpush1.bf16.msra.mxu0 0
    %591 = vmatprep.subr.bf16.mxu0 0
    %592 = vmatpush1.bf16.msra.mxu0 0
    %593 = vmatprep.subr.bf16.mxu0 0
    %594 = vmatpush1.bf16.msra.mxu0 0
    %595 = vmatprep.subr.bf16.mxu0 0
    %596 = vmatpush1.bf16.msra.mxu0 0
    %597 = vmatprep.subr.bf16.mxu0 0
    %598 = vmatpush1.bf16.msra.mxu0 0
    %599 = vmatprep.subr.bf16.mxu0 0
    %600 = vmatpush1.bf16.msra.mxu0 0
    %601 = vmatprep.subr.bf16.mxu0 0
    %602 = vmatpush1.bf16.msra.mxu0 0
    %603 = vmatprep.mubr.bf16.mxu0 0
    %604 = vmatmul.mubr.bf16.gmra.mrb[0].mxu0 %v562
    %v605 = vpop.f32.mrb[0].mxu0
    %v606 = vadd.f32 0.0, %v605
    %v607 = vpop.f32.mrb[0].mxu0
    %v608 = vadd.f32 0.0, %v607
    %v609 = vpop.f32.mrb[0].mxu0
    %v610 = vpop.f32.mrb[0].mxu0
    %611 = vdwg.mxu0
    %612 = vmatprep.subr.bf16.mxu0 %v413
    %613 = vmatpush1.bf16.msra.mxu0 %v412
    %614 = vmatprep.subr.bf16.mxu0 %v417
    %615 = vmatpush1.bf16.msra.mxu0 %v416
    %616 = vmatprep.subr.bf16.mxu0 %v421
    %617 = vmatpush1.bf16.msra.mxu0 %v420
    %618 = vmatprep.subr.bf16.mxu0 %v425
    %619 = vmatpush1.bf16.msra.mxu0 %v424
    %620 = vmatprep.subr.bf16.mxu0 %v429
    %621 = vmatpush1.bf16.msra.mxu0 %v428
    %622 = vmatprep.subr.bf16.mxu0 %v433
    %623 = vmatpush1.bf16.msra.mxu0 %v432
    %624 = vmatprep.subr.bf16.mxu0 %v437
    %625 = vmatpush1.bf16.msra.mxu0 %v436
    %626 = vmatprep.subr.bf16.mxu0 %v441
    %627 = vmatpush1.bf16.msra.mxu0 %v440
    %628 = vmatprep.subr.bf16.mxu0 0
    %629 = vmatpush1.bf16.msra.mxu0 0
    %630 = vmatprep.subr.bf16.mxu0 0
    %631 = vmatpush1.bf16.msra.mxu0 0
    %632 = vmatprep.subr.bf16.mxu0 0
    %633 = vmatpush1.bf16.msra.mxu0 0
    %634 = vmatprep.subr.bf16.mxu0 0
    %635 = vmatpush1.bf16.msra.mxu0 0
    %636 = vmatprep.subr.bf16.mxu0 0
    %637 = vmatpush1.bf16.msra.mxu0 0
    %638 = vmatprep.subr.bf16.mxu0 0
    %639 = vmatpush1.bf16.msra.mxu0 0
    %640 = vmatprep.subr.bf16.mxu0 0
    %641 = vmatpush1.bf16.msra.mxu0 0
    %642 = vmatprep.subr.bf16.mxu0 0
    %643 = vmatpush1.bf16.msra.mxu0 0
    %644 = vmatprep.mubr.bf16.mxu0 0
    %645 = vmatmul.mubr.bf16.gmra.mrb[0].mxu0 %v562
    %v646 = vpop.f32.mrb[0].mxu0
    %v647 = vadd.f32 0.0, %v646
    %v648 = vpop.f32.mrb[0].mxu0
    %v649 = vadd.f32 0.0, %v648
    %v650 = vpop.f32.mrb[0].mxu0
    %v651 = vpop.f32.mrb[0].mxu0
    %652 = vdwg.mxu0
    %v653 = vadd.f32 %v567, %v606
    %v654 = vadd.f32 %v568, %v608
    %v655 = vadd.f32 %v569, %v647
    %v656 = vadd.f32 %v570, %v649
    %v657 = vxor.u32 %v653, 2147483648
    %v658 = vmul.f32 %v657, 1.442695
    %v659 = vpow.pop %v658
    %v660 = vadd.f32 %v659, 1.0
    %v661 = vrcp.pop %v660
    %v662 = vmul.f32 1.0, %v661
    %v663 = vxor.u32 %v654, 2147483648
    %v664 = vmul.f32 %v663, 1.442695
    %v665 = vpow.pop %v664
    %v666 = vadd.f32 %v665, 1.0
    %v667 = vrcp.pop %v666
    %v668 = vmul.f32 1.0, %v667
    %v669 = vtanh.pop %v655
    %v670 = vxor.u32 %v656, 2147483648
    %v671 = vmul.f32 %v670, 1.442695
    %v672 = vpow.pop %v671
    %v673 = vadd.f32 %v672, 1.0
    %v674 = vrcp.pop %v673
    %v675 = vmul.f32 1.0, %v674
    %v676 = vmul.f32 %v668, %v559
    %v677 = vmul.f32 %v662, %v669
    %v678 = vadd.f32 %v676, %v677
    %v679 = vtanh.pop %v678
    %v680 = vmul.f32 %v675, %v679
    %v681 = vpack.c.bf16 %v680, %v680
    %s682 = scalar_lea.vmem [#allocation14], 4
    %683 = vst [vmem:[%s682] sm:$0xf] %v681
    %s684 = smul.u32 2, 4
    %s685 = smul.addr %s684, 8
    %s686 = scalar_lea.vmem [#allocation4], %s685
    %v687 = vld [vmem:[%s686] sm:$0xff]
    %v688 = vld [vmem:[%s686 + $0x8] sm:$0xff]
    %v689 = vld [vmem:[%s686 + $0x10] sm:$0xff]
    %v690 = vld [vmem:[%s686 + $0x18] sm:$0xff]
    %691 = vmatprep.subr.bf16.mxu0 %v411
    %692 = vmatpush1.bf16.msra.mxu0 %v410
    %693 = vmatprep.subr.bf16.mxu0 %v415
    %694 = vmatpush1.bf16.msra.mxu0 %v414
    %695 = vmatprep.subr.bf16.mxu0 %v419
    %696 = vmatpush1.bf16.msra.mxu0 %v418
    %697 = vmatprep.subr.bf16.mxu0 %v423
    %698 = vmatpush1.bf16.msra.mxu0 %v422
    %699 = vmatprep.subr.bf16.mxu0 %v427
    %700 = vmatpush1.bf16.msra.mxu0 %v426
    %701 = vmatprep.subr.bf16.mxu0 %v431
    %702 = vmatpush1.bf16.msra.mxu0 %v430
    %703 = vmatprep.subr.bf16.mxu0 %v435
    %704 = vmatpush1.bf16.msra.mxu0 %v434
    %705 = vmatprep.subr.bf16.mxu0 %v439
    %706 = vmatpush1.bf16.msra.mxu0 %v438
    %707 = vmatprep.subr.bf16.mxu0 0
    %708 = vmatpush1.bf16.msra.mxu0 0
    %709 = vmatprep.subr.bf16.mxu0 0
    %710 = vmatpush1.bf16.msra.mxu0 0
    %711 = vmatprep.subr.bf16.mxu0 0
    %712 = vmatpush1.bf16.msra.mxu0 0
    %713 = vmatprep.subr.bf16.mxu0 0
    %714 = vmatpush1.bf16.msra.mxu0 0
    %715 = vmatprep.subr.bf16.mxu0 0
    %716 = vmatpush1.bf16.msra.mxu0 0
    %717 = vmatprep.subr.bf16.mxu0 0
    %718 = vmatpush1.bf16.msra.mxu0 0
    %719 = vmatprep.subr.bf16.mxu0 0
    %720 = vmatpush1.bf16.msra.mxu0 0
    %721 = vmatprep.subr.bf16.mxu0 0
    %722 = vmatpush1.bf16.msra.mxu0 0
    %723 = vmatprep.mubr.bf16.mxu0 0
    %724 = vmatmul.mubr.bf16.gmra.mrb[0].mxu0 %v681
    %v725 = vpop.f32.mrb[0].mxu0
    %v726 = vadd.f32 0.0, %v725
    %v727 = vpop.f32.mrb[0].mxu0
    %v728 = vadd.f32 0.0, %v727
    %v729 = vpop.f32.mrb[0].mxu0
    %v730 = vpop.f32.mrb[0].mxu0
    %731 = vdwg.mxu0
    %732 = vmatprep.subr.bf16.mxu0 %v413
    %733 = vmatpush1.bf16.msra.mxu0 %v412
    %734 = vmatprep.subr.bf16.mxu0 %v417
    %735 = vmatpush1.bf16.msra.mxu0 %v416
    %736 = vmatprep.subr.bf16.mxu0 %v421
    %737 = vmatpush1.bf16.msra.mxu0 %v420
    %738 = vmatprep.subr.bf16.mxu0 %v425
    %739 = vmatpush1.bf16.msra.mxu0 %v424
    %740 = vmatprep.subr.bf16.mxu0 %v429
    %741 = vmatpush1.bf16.msra.mxu0 %v428
    %742 = vmatprep.subr.bf16.mxu0 %v433
    %743 = vmatpush1.bf16.msra.mxu0 %v432
    %744 = vmatprep.subr.bf16.mxu0 %v437
    %745 = vmatpush1.bf16.msra.mxu0 %v436
    %746 = vmatprep.subr.bf16.mxu0 %v441
    %747 = vmatpush1.bf16.msra.mxu0 %v440
    %748 = vmatprep.subr.bf16.mxu0 0
    %749 = vmatpush1.bf16.msra.mxu0 0
    %750 = vmatprep.subr.bf16.mxu0 0
    %751 = vmatpush1.bf16.msra.mxu0 0
    %752 = vmatprep.subr.bf16.mxu0 0
    %753 = vmatpush1.bf16.msra.mxu0 0
    %754 = vmatprep.subr.bf16.mxu0 0
    %755 = vmatpush1.bf16.msra.mxu0 0
    %756 = vmatprep.subr.bf16.mxu0 0
    %757 = vmatpush1.bf16.msra.mxu0 0
    %758 = vmatprep.subr.bf16.mxu0 0
    %759 = vmatpush1.bf16.msra.mxu0 0
    %760 = vmatprep.subr.bf16.mxu0 0
    %761 = vmatpush1.bf16.msra.mxu0 0
    %762 = vmatprep.subr.bf16.mxu0 0
    %763 = vmatpush1.bf16.msra.mxu0 0
    %764 = vmatprep.mubr.bf16.mxu0 0
    %765 = vmatmul.mubr.bf16.gmra.mrb[0].mxu0 %v681
    %v766 = vpop.f32.mrb[0].mxu0
    %v767 = vadd.f32 0.0, %v766
    %v768 = vpop.f32.mrb[0].mxu0
    %v769 = vadd.f32 0.0, %v768
    %v770 = vpop.f32.mrb[0].mxu0
    %v771 = vpop.f32.mrb[0].mxu0
    %772 = vdwg.mxu0
    %v773 = vadd.f32 %v687, %v726
    %v774 = vadd.f32 %v688, %v728
    %v775 = vadd.f32 %v689, %v767
    %v776 = vadd.f32 %v690, %v769
    %v777 = vxor.u32 %v773, 2147483648
    %v778 = vmul.f32 %v777, 1.442695
    %v779 = vpow.pop %v778
    %v780 = vadd.f32 %v779, 1.0
    %v781 = vrcp.pop %v780
    %v782 = vmul.f32 1.0, %v781
    %v783 = vxor.u32 %v774, 2147483648
    %v784 = vmul.f32 %v783, 1.442695
    %v785 = vpow.pop %v784
    %v786 = vadd.f32 %v785, 1.0
    %v787 = vrcp.pop %v786
    %v788 = vmul.f32 1.0, %v787
    %v789 = vtanh.pop %v775
    %v790 = vxor.u32 %v776, 2147483648
    %v791 = vmul.f32 %v790, 1.442695
    %v792 = vpow.pop %v791
    %v793 = vadd.f32 %v792, 1.0
    %v794 = vrcp.pop %v793
    %v795 = vmul.f32 1.0, %v794
    %v796 = vmul.f32 %v788, %v678
    %v797 = vmul.f32 %v782, %v789
    %v798 = vadd.f32 %v796, %v797
    %v799 = vtanh.pop %v798
    %v800 = vmul.f32 %v795, %v799
    %v801 = vpack.c.bf16 %v800, %v800
    %s802 = scalar_lea.vmem [#allocation14], 8
    %803 = vst [vmem:[%s802] sm:$0xf] %v801
    %s804 = smul.u32 3, 4
    %s805 = smul.addr %s804, 8
    %s806 = scalar_lea.vmem [#allocation4], %s805
    %v807 = vld [vmem:[%s806] sm:$0xff]
    %v808 = vld [vmem:[%s806 + $0x8] sm:$0xff]
    %v809 = vld [vmem:[%s806 + $0x10] sm:$0xff]
    %v810 = vld [vmem:[%s806 + $0x18] sm:$0xff]
    %811 = vmatprep.subr.bf16.mxu0 %v411
    %812 = vmatpush1.bf16.msra.mxu0 %v410
    %813 = vmatprep.subr.bf16.mxu0 %v415
    %814 = vmatpush1.bf16.msra.mxu0 %v414
    %815 = vmatprep.subr.bf16.mxu0 %v419
    %816 = vmatpush1.bf16.msra.mxu0 %v418
    %817 = vmatprep.subr.bf16.mxu0 %v423
    %818 = vmatpush1.bf16.msra.mxu0 %v422
    %819 = vmatprep.subr.bf16.mxu0 %v427
    %820 = vmatpush1.bf16.msra.mxu0 %v426
    %821 = vmatprep.subr.bf16.mxu0 %v431
    %822 = vmatpush1.bf16.msra.mxu0 %v430
    %823 = vmatprep.subr.bf16.mxu0 %v435
    %824 = vmatpush1.bf16.msra.mxu0 %v434
    %825 = vmatprep.subr.bf16.mxu0 %v439
    %826 = vmatpush1.bf16.msra.mxu0 %v438
    %827 = vmatprep.subr.bf16.mxu0 0
    %828 = vmatpush1.bf16.msra.mxu0 0
    %829 = vmatprep.subr.bf16.mxu0 0
    %830 = vmatpush1.bf16.msra.mxu0 0
    %831 = vmatprep.subr.bf16.mxu0 0
    %832 = vmatpush1.bf16.msra.mxu0 0
    %833 = vmatprep.subr.bf16.mxu0 0
    %834 = vmatpush1.bf16.msra.mxu0 0
    %835 = vmatprep.subr.bf16.mxu0 0
    %836 = vmatpush1.bf16.msra.mxu0 0
    %837 = vmatprep.subr.bf16.mxu0 0
    %838 = vmatpush1.bf16.msra.mxu0 0
    %839 = vmatprep.subr.bf16.mxu0 0
    %840 = vmatpush1.bf16.msra.mxu0 0
    %841 = vmatprep.subr.bf16.mxu0 0
    %842 = vmatpush1.bf16.msra.mxu0 0
    %843 = vmatprep.mubr.bf16.mxu0 0
    %844 = vmatmul.mubr.bf16.gmra.mrb[0].mxu0 %v801
    %v845 = vpop.f32.mrb[0].mxu0
    %v846 = vadd.f32 0.0, %v845
    %v847 = vpop.f32.mrb[0].mxu0
    %v848 = vadd.f32 0.0, %v847
    %v849 = vpop.f32.mrb[0].mxu0
    %v850 = vpop.f32.mrb[0].mxu0
    %851 = vdwg.mxu0
    %852 = vmatprep.subr.bf16.mxu0 %v413
    %853 = vmatpush1.bf16.msra.mxu0 %v412
    %854 = vmatprep.subr.bf16.mxu0 %v417
    %855 = vmatpush1.bf16.msra.mxu0 %v416
    %856 = vmatprep.subr.bf16.mxu0 %v421
    %857 = vmatpush1.bf16.msra.mxu0 %v420
    %858 = vmatprep.subr.bf16.mxu0 %v425
    %859 = vmatpush1.bf16.msra.mxu0 %v424
    %860 = vmatprep.subr.bf16.mxu0 %v429
    %861 = vmatpush1.bf16.msra.mxu0 %v428
    %862 = vmatprep.subr.bf16.mxu0 %v433
    %863 = vmatpush1.bf16.msra.mxu0 %v432
    %864 = vmatprep.subr.bf16.mxu0 %v437
    %865 = vmatpush1.bf16.msra.mxu0 %v436
    %866 = vmatprep.subr.bf16.mxu0 %v441
    %867 = vmatpush1.bf16.msra.mxu0 %v440
    %868 = vmatprep.subr.bf16.mxu0 0
    %869 = vmatpush1.bf16.msra.mxu0 0
    %870 = vmatprep.subr.bf16.mxu0 0
    %871 = vmatpush1.bf16.msra.mxu0 0
    %872 = vmatprep.subr.bf16.mxu0 0
    %873 = vmatpush1.bf16.msra.mxu0 0
    %874 = vmatprep.subr.bf16.mxu0 0
    %875 = vmatpush1.bf16.msra.mxu0 0
    %876 = vmatprep.subr.bf16.mxu0 0
    %877 = vmatpush1.bf16.msra.mxu0 0
    %878 = vmatprep.subr.bf16.mxu0 0
    %879 = vmatpush1.bf16.msra.mxu0 0
    %880 = vmatprep.subr.bf16.mxu0 0
    %881 = vmatpush1.bf16.msra.mxu0 0
    %882 = vmatprep.subr.bf16.mxu0 0
    %883 = vmatpush1.bf16.msra.mxu0 0
    %884 = vmatprep.mubr.bf16.mxu0 0
    %885 = vmatmul.mubr.bf16.gmra.mrb[0].mxu0 %v801
    %v886 = vpop.f32.mrb[0].mxu0
    %v887 = vadd.f32 0.0, %v886
    %v888 = vpop.f32.mrb[0].mxu0
    %v889 = vadd.f32 0.0, %v888
    %v890 = vpop.f32.mrb[0].mxu0
    %v891 = vpop.f32.mrb[0].mxu0
    %892 = vdwg.mxu0
    %v893 = vadd.f32 %v807, %v846
    %v894 = vadd.f32 %v808, %v848
    %v895 = vadd.f32 %v809, %v887
    %v896 = vadd.f32 %v810, %v889
    %v897 = vxor.u32 %v893, 2147483648
    %v898 = vmul.f32 %v897, 1.442695
    %v899 = vpow.pop %v898
    %v900 = vadd.f32 %v899, 1.0
    %v901 = vrcp.pop %v900
    %v902 = vmul.f32 1.0, %v901
    %v903 = vxor.u32 %v894, 2147483648
    %v904 = vmul.f32 %v903, 1.442695
    %v905 = vpow.pop %v904
    %v906 = vadd.f32 %v905, 1.0
    %v907 = vrcp.pop %v906
    %v908 = vmul.f32 1.0, %v907
    %v909 = vtanh.pop %v895
    %v910 = vxor.u32 %v896, 2147483648
    %v911 = vmul.f32 %v910, 1.442695
    %v912 = vpow.pop %v911
    %v913 = vadd.f32 %v912, 1.0
    %v914 = vrcp.pop %v913
    %v915 = vmul.f32 1.0, %v914
    %v916 = vmul.f32 %v908, %v798
    %v917 = vmul.f32 %v902, %v909
    %v918 = vadd.f32 %v916, %v917
    %v919 = vtanh.pop %v918
    %v920 = vmul.f32 %v915, %v919
    %v921 = vpack.c.bf16 %v920, %v920
    %s922 = scalar_lea.vmem [#allocation14], 12
    %923 = vst [vmem:[%s922] sm:$0xf] %v921
    %s924 = smul.u32 4, 4
    %s925 = smul.addr %s924, 8
    %s926 = scalar_lea.vmem [#allocation4], %s925
    %v927 = vld [vmem:[%s926] sm:$0xff]
    %v928 = vld [vmem:[%s926 + $0x8] sm:$0xff]
    %v929 = vld [vmem:[%s926 + $0x10] sm:$0xff]
    %v930 = vld [vmem:[%s926 + $0x18] sm:$0xff]
    %931 = vmatprep.subr.bf16.mxu0 %v411
    %932 = vmatpush1.bf16.msra.mxu0 %v410
    %933 = vmatprep.subr.bf16.mxu0 %v415
    %934 = vmatpush1.bf16.msra.mxu0 %v414
    %935 = vmatprep.subr.bf16.mxu0 %v419
    %936 = vmatpush1.bf16.msra.mxu0 %v418
    %937 = vmatprep.subr.bf16.mxu0 %v423
    %938 = vmatpush1.bf16.msra.mxu0 %v422
    %939 = vmatprep.subr.bf16.mxu0 %v427
    %940 = vmatpush1.bf16.msra.mxu0 %v426
    %941 = vmatprep.subr.bf16.mxu0 %v431
    %942 = vmatpush1.bf16.msra.mxu0 %v430
    %943 = vmatprep.subr.bf16.mxu0 %v435
    %944 = vmatpush1.bf16.msra.mxu0 %v434
    %945 = vmatprep.subr.bf16.mxu0 %v439
    %946 = vmatpush1.bf16.msra.mxu0 %v438
    %947 = vmatprep.subr.bf16.mxu0 0
    %948 = vmatpush1.bf16.msra.mxu0 0
    %949 = vmatprep.subr.bf16.mxu0 0
    %950 = vmatpush1.bf16.msra.mxu0 0
    %951 = vmatprep.subr.bf16.mxu0 0
    %952 = vmatpush1.bf16.msra.mxu0 0
    %953 = vmatprep.subr.bf16.mxu0 0
    %954 = vmatpush1.bf16.msra.mxu0 0
    %955 = vmatprep.subr.bf16.mxu0 0
    %956 = vmatpush1.bf16.msra.mxu0 0
    %957 = vmatprep.subr.bf16.mxu0 0
    %958 = vmatpush1.bf16.msra.mxu0 0
    %959 = vmatprep.subr.bf16.mxu0 0
    %960 = vmatpush1.bf16.msra.mxu0 0
    %961 = vmatprep.subr.bf16.mxu0 0
    %962 = vmatpush1.bf16.msra.mxu0 0
    %963 = vmatprep.mubr.bf16.mxu0 0
    %964 = vmatmul.mubr.bf16.gmra.mrb[0].mxu0 %v921
    %v965 = vpop.f32.mrb[0].mxu0
    %v966 = vadd.f32 0.0, %v965
    %v967 = vpop.f32.mrb[0].mxu0
    %v968 = vadd.f32 0.0, %v967
    %v969 = vpop.f32.mrb[0].mxu0
    %v970 = vpop.f32.mrb[0].mxu0
    %971 = vdwg.mxu0
    %972 = vmatprep.subr.bf16.mxu0 %v413
    %973 = vmatpush1.bf16.msra.mxu0 %v412
    %974 = vmatprep.subr.bf16.mxu0 %v417
    %975 = vmatpush1.bf16.msra.mxu0 %v416
    %976 = vmatprep.subr.bf16.mxu0 %v421
    %977 = vmatpush1.bf16.msra.mxu0 %v420
    %978 = vmatprep.subr.bf16.mxu0 %v425
    %979 = vmatpush1.bf16.msra.mxu0 %v424
    %980 = vmatprep.subr.bf16.mxu0 %v429
    %981 = vmatpush1.bf16.msra.mxu0 %v428
    %982 = vmatprep.subr.bf16.mxu0 %v433
    %983 = vmatpush1.bf16.msra.mxu0 %v432
    %984 = vmatprep.subr.bf16.mxu0 %v437
    %985 = vmatpush1.bf16.msra.mxu0 %v436
    %986 = vmatprep.subr.bf16.mxu0 %v441
    %987 = vmatpush1.bf16.msra.mxu0 %v440
    %988 = vmatprep.subr.bf16.mxu0 0
    %989 = vmatpush1.bf16.msra.mxu0 0
    %990 = vmatprep.subr.bf16.mxu0 0
    %991 = vmatpush1.bf16.msra.mxu0 0
    %992 = vmatprep.subr.bf16.mxu0 0
    %993 = vmatpush1.bf16.msra.mxu0 0
    %994 = vmatprep.subr.bf16.mxu0 0
    %995 = vmatpush1.bf16.msra.mxu0 0
    %996 = vmatprep.subr.bf16.mxu0 0
    %997 = vmatpush1.bf16.msra.mxu0 0
    %998 = vmatprep.subr.bf16.mxu0 0
    %999 = vmatpush1.bf16.msra.mxu0 0
    %1000 = vmatprep.subr.bf16.mxu0 0
    %1001 = vmatpush1.bf16.msra.mxu0 0
    %1002 = vmatprep.subr.bf16.mxu0 0
    %1003 = vmatpush1.bf16.msra.mxu0 0
    %1004 = vmatprep.mubr.bf16.mxu0 0
    %1005 = vmatmul.mubr.bf16.gmra.mrb[0].mxu0 %v921
    %v1006 = vpop.f32.mrb[0].mxu0
    %v1007 = vadd.f32 0.0, %v1006
    %v1008 = vpop.f32.mrb[0].mxu0
    %v1009 = vadd.f32 0.0, %v1008
    %v1010 = vpop.f32.mrb[0].mxu0
    %v1011 = vpop.f32.mrb[0].mxu0
    %1012 = vdwg.mxu0
    %v1013 = vadd.f32 %v927, %v966
    %v1014 = vadd.f32 %v928, %v968
    %v1015 = vadd.f32 %v929, %v1007
    %v1016 = vadd.f32 %v930, %v1009
    %v1017 = vxor.u32 %v1013, 2147483648
    %v1018 = vmul.f32 %v1017, 1.442695
    %v1019 = vpow.pop %v1018
    %v1020 = vadd.f32 %v1019, 1.0
    %v1021 = vrcp.pop %v1020
    %v1022 = vmul.f32 1.0, %v1021
    %v1023 = vxor.u32 %v1014, 2147483648
    %v1024 = vmul.f32 %v1023, 1.442695
    %v1025 = vpow.pop %v1024
    %v1026 = vadd.f32 %v1025, 1.0
    %v1027 = vrcp.pop %v1026
    %v1028 = vmul.f32 1.0, %v1027
    %v1029 = vtanh.pop %v1015
    %v1030 = vxor.u32 %v1016, 2147483648
    %v1031 = vmul.f32 %v1030, 1.442695
    %v1032 = vpow.pop %v1031
    %v1033 = vadd.f32 %v1032, 1.0
    %v1034 = vrcp.pop %v1033
    %v1035 = vmul.f32 1.0, %v1034
    %v1036 = vmul.f32 %v1028, %v918
    %v1037 = vmul.f32 %v1022, %v1029
    %v1038 = vadd.f32 %v1036, %v1037
    %v1039 = vtanh.pop %v1038
    %v1040 = vmul.f32 %v1035, %v1039
    %v1041 = vpack.c.bf16 %v1040, %v1040
    %s1042 = scalar_lea.vmem [#allocation14], 16
    %1043 = vst [vmem:[%s1042] sm:$0xf] %v1041
    %s1044 = smul.u32 5, 4
    %s1045 = smul.addr %s1044, 8
    %s1046 = scalar_lea.vmem [#allocation4], %s1045
    %v1047 = vld [vmem:[%s1046] sm:$0xff]
    %v1048 = vld [vmem:[%s1046 + $0x8] sm:$0xff]
    %v1049 = vld [vmem:[%s1046 + $0x10] sm:$0xff]
    %v1050 = vld [vmem:[%s1046 + $0x18] sm:$0xff]
    %1051 = vmatprep.subr.bf16.mxu0 %v411
    %1052 = vmatpush1.bf16.msra.mxu0 %v410
    %1053 = vmatprep.subr.bf16.mxu0 %v415
    %1054 = vmatpush1.bf16.msra.mxu0 %v414
    %1055 = vmatprep.subr.bf16.mxu0 %v419
    %1056 = vmatpush1.bf16.msra.mxu0 %v418
    %1057 = vmatprep.subr.bf16.mxu0 %v423
    %1058 = vmatpush1.bf16.msra.mxu0 %v422
    %1059 = vmatprep.subr.bf16.mxu0 %v427
    %1060 = vmatpush1.bf16.msra.mxu0 %v426
    %1061 = vmatprep.subr.bf16.mxu0 %v431
    %1062 = vmatpush1.bf16.msra.mxu0 %v430
    %1063 = vmatprep.subr.bf16.mxu0 %v435
    %1064 = vmatpush1.bf16.msra.mxu0 %v434
    %1065 = vmatprep.subr.bf16.mxu0 %v439
    %1066 = vmatpush1.bf16.msra.mxu0 %v438
    %1067 = vmatprep.subr.bf16.mxu0 0
    %1068 = vmatpush1.bf16.msra.mxu0 0
    %1069 = vmatprep.subr.bf16.mxu0 0
    %1070 = vmatpush1.bf16.msra.mxu0 0
    %1071 = vmatprep.subr.bf16.mxu0 0
    %1072 = vmatpush1.bf16.msra.mxu0 0
    %1073 = vmatprep.subr.bf16.mxu0 0
    %1074 = vmatpush1.bf16.msra.mxu0 0
    %1075 = vmatprep.subr.bf16.mxu0 0
    %1076 = vmatpush1.bf16.msra.mxu0 0
    %1077 = vmatprep.subr.bf16.mxu0 0
    %1078 = vmatpush1.bf16.msra.mxu0 0
    %1079 = vmatprep.subr.bf16.mxu0 0
    %1080 = vmatpush1.bf16.msra.mxu0 0
    %1081 = vmatprep.subr.bf16.mxu0 0
    %1082 = vmatpush1.bf16.msra.mxu0 0
    %1083 = vmatprep.mubr.bf16.mxu0 0
    %1084 = vmatmul.mubr.bf16.gmra.mrb[0].mxu0 %v1041
    %v1085 = vpop.f32.mrb[0].mxu0
    %v1086 = vadd.f32 0.0, %v1085
    %v1087 = vpop.f32.mrb[0].mxu0
    %v1088 = vadd.f32 0.0, %v1087
    %v1089 = vpop.f32.mrb[0].mxu0
    %v1090 = vpop.f32.mrb[0].mxu0
    %1091 = vdwg.mxu0
    %1092 = vmatprep.subr.bf16.mxu0 %v413
    %1093 = vmatpush1.bf16.msra.mxu0 %v412
    %1094 = vmatprep.subr.bf16.mxu0 %v417
    %1095 = vmatpush1.bf16.msra.mxu0 %v416
    %1096 = vmatprep.subr.bf16.mxu0 %v421
    %1097 = vmatpush1.bf16.msra.mxu0 %v420
    %1098 = vmatprep.subr.bf16.mxu0 %v425
    %1099 = vmatpush1.bf16.msra.mxu0 %v424
    %1100 = vmatprep.subr.bf16.mxu0 %v429
    %1101 = vmatpush1.bf16.msra.mxu0 %v428
    %1102 = vmatprep.subr.bf16.mxu0 %v433
    %1103 = vmatpush1.bf16.msra.mxu0 %v432
    %1104 = vmatprep.subr.bf16.mxu0 %v437
    %1105 = vmatpush1.bf16.msra.mxu0 %v436
    %1106 = vmatprep.subr.bf16.mxu0 %v441
    %1107 = vmatpush1.bf16.msra.mxu0 %v440
    %1108 = vmatprep.subr.bf16.mxu0 0
    %1109 = vmatpush1.bf16.msra.mxu0 0
    %1110 = vmatprep.subr.bf16.mxu0 0
    %1111 = vmatpush1.bf16.msra.mxu0 0
    %1112 = vmatprep.subr.bf16.mxu0 0
    %1113 = vmatpush1.bf16.msra.mxu0 0
    %1114 = vmatprep.subr.bf16.mxu0 0
    %1115 = vmatpush1.bf16.msra.mxu0 0
    %1116 = vmatprep.subr.bf16.mxu0 0
    %1117 = vmatpush1.bf16.msra.mxu0 0
    %1118 = vmatprep.subr.bf16.mxu0 0
    %1119 = vmatpush1.bf16.msra.mxu0 0
    %1120 = vmatprep.subr.bf16.mxu0 0
    %1121 = vmatpush1.bf16.msra.mxu0 0
    %1122 = vmatprep.subr.bf16.mxu0 0
    %1123 = vmatpush1.bf16.msra.mxu0 0
    %1124 = vmatprep.mubr.bf16.mxu0 0
    %1125 = vmatmul.mubr.bf16.gmra.mrb[0].mxu0 %v1041
    %v1126 = vpop.f32.mrb[0].mxu0
    %v1127 = vadd.f32 0.0, %v1126
    %v1128 = vpop.f32.mrb[0].mxu0
    %v1129 = vadd.f32 0.0, %v1128
    %v1130 = vpop.f32.mrb[0].mxu0
    %v1131 = vpop.f32.mrb[0].mxu0
    %1132 = vdwg.mxu0
    %v1133 = vadd.f32 %v1047, %v1086
    %v1134 = vadd.f32 %v1048, %v1088
    %v1135 = vadd.f32 %v1049, %v1127
    %v1136 = vadd.f32 %v1050, %v1129
    %v1137 = vxor.u32 %v1133, 2147483648
    %v1138 = vmul.f32 %v1137, 1.442695
    %v1139 = vpow.pop %v1138
    %v1140 = vadd.f32 %v1139, 1.0
    %v1141 = vrcp.pop %v1140
    %v1142 = vmul.f32 1.0, %v1141
    %v1143 = vxor.u32 %v1134, 2147483648
    %v1144 = vmul.f32 %v1143, 1.442695
    %v1145 = vpow.pop %v1144
    %v1146 = vadd.f32 %v1145, 1.0
    %v1147 = vrcp.pop %v1146
    %v1148 = vmul.f32 1.0, %v1147
    %v1149 = vtanh.pop %v1135
    %v1150 = vxor.u32 %v1136, 2147483648
    %v1151 = vmul.f32 %v1150, 1.442695
    %v1152 = vpow.pop %v1151
    %v1153 = vadd.f32 %v1152, 1.0
    %v1154 = vrcp.pop %v1153
    %v1155 = vmul.f32 1.0, %v1154
    %v1156 = vmul.f32 %v1148, %v1038
    %v1157 = vmul.f32 %v1142, %v1149
    %v1158 = vadd.f32 %v1156, %v1157
    %v1159 = vtanh.pop %v1158
    %v1160 = vmul.f32 %v1155, %v1159
    %v1161 = vpack.c.bf16 %v1160, %v1160
    %s1162 = scalar_lea.vmem [#allocation14], 20
    %1163 = vst [vmem:[%s1162] sm:$0xf] %v1161
    %s1164 = smul.u32 6, 4
    %s1165 = smul.addr %s1164, 8
    %s1166 = scalar_lea.vmem [#allocation4], %s1165
    %v1167 = vld [vmem:[%s1166] sm:$0xff]
    %v1168 = vld [vmem:[%s1166 + $0x8] sm:$0xff]
    %v1169 = vld [vmem:[%s1166 + $0x10] sm:$0xff]
    %v1170 = vld [vmem:[%s1166 + $0x18] sm:$0xff]
    %1171 = vmatprep.subr.bf16.mxu0 %v411
    %1172 = vmatpush1.bf16.msra.mxu0 %v410
    %1173 = vmatprep.subr.bf16.mxu0 %v415
    %1174 = vmatpush1.bf16.msra.mxu0 %v414
    %1175 = vmatprep.subr.bf16.mxu0 %v419
    %1176 = vmatpush1.bf16.msra.mxu0 %v418
    %1177 = vmatprep.subr.bf16.mxu0 %v423
    %1178 = vmatpush1.bf16.msra.mxu0 %v422
    %1179 = vmatprep.subr.bf16.mxu0 %v427
    %1180 = vmatpush1.bf16.msra.mxu0 %v426
    %1181 = vmatprep.subr.bf16.mxu0 %v431
    %1182 = vmatpush1.bf16.msra.mxu0 %v430
    %1183 = vmatprep.subr.bf16.mxu0 %v435
    %1184 = vmatpush1.bf16.msra.mxu0 %v434
    %1185 = vmatprep.subr.bf16.mxu0 %v439
    %1186 = vmatpush1.bf16.msra.mxu0 %v438
    %1187 = vmatprep.subr.bf16.mxu0 0
    %1188 = vmatpush1.bf16.msra.mxu0 0
    %1189 = vmatprep.subr.bf16.mxu0 0
    %1190 = vmatpush1.bf16.msra.mxu0 0
    %1191 = vmatprep.subr.bf16.mxu0 0
    %1192 = vmatpush1.bf16.msra.mxu0 0
    %1193 = vmatprep.subr.bf16.mxu0 0
    %1194 = vmatpush1.bf16.msra.mxu0 0
    %1195 = vmatprep.subr.bf16.mxu0 0
    %1196 = vmatpush1.bf16.msra.mxu0 0
    %1197 = vmatprep.subr.bf16.mxu0 0
    %1198 = vmatpush1.bf16.msra.mxu0 0
    %1199 = vmatprep.subr.bf16.mxu0 0
    %1200 = vmatpush1.bf16.msra.mxu0 0
    %1201 = vmatprep.subr.bf16.mxu0 0
    %1202 = vmatpush1.bf16.msra.mxu0 0
    %1203 = vmatprep.mubr.bf16.mxu0 0
    %1204 = vmatmul.mubr.bf16.gmra.mrb[0].mxu0 %v1161
    %v1205 = vpop.f32.mrb[0].mxu0
    %v1206 = vadd.f32 0.0, %v1205
    %v1207 = vpop.f32.mrb[0].mxu0
    %v1208 = vadd.f32 0.0, %v1207
    %v1209 = vpop.f32.mrb[0].mxu0
    %v1210 = vpop.f32.mrb[0].mxu0
    %1211 = vdwg.mxu0
    %1212 = vmatprep.subr.bf16.mxu0 %v413
    %1213 = vmatpush1.bf16.msra.mxu0 %v412
    %1214 = vmatprep.subr.bf16.mxu0 %v417
    %1215 = vmatpush1.bf16.msra.mxu0 %v416
    %1216 = vmatprep.subr.bf16.mxu0 %v421
    %1217 = vmatpush1.bf16.msra.mxu0 %v420
    %1218 = vmatprep.subr.bf16.mxu0 %v425
    %1219 = vmatpush1.bf16.msra.mxu0 %v424
    %1220 = vmatprep.subr.bf16.mxu0 %v429
    %1221 = vmatpush1.bf16.msra.mxu0 %v428
    %1222 = vmatprep.subr.bf16.mxu0 %v433
    %1223 = vmatpush1.bf16.msra.mxu0 %v432
    %1224 = vmatprep.subr.bf16.mxu0 %v437
    %1225 = vmatpush1.bf16.msra.mxu0 %v436
    %1226 = vmatprep.subr.bf16.mxu0 %v441
    %1227 = vmatpush1.bf16.msra.mxu0 %v440
    %1228 = vmatprep.subr.bf16.mxu0 0
    %1229 = vmatpush1.bf16.msra.mxu0 0
    %1230 = vmatprep.subr.bf16.mxu0 0
    %1231 = vmatpush1.bf16.msra.mxu0 0
    %1232 = vmatprep.subr.bf16.mxu0 0
    %1233 = vmatpush1.bf16.msra.mxu0 0
    %1234 = vmatprep.subr.bf16.mxu0 0
    %1235 = vmatpush1.bf16.msra.mxu0 0
    %1236 = vmatprep.subr.bf16.mxu0 0
    %1237 = vmatpush1.bf16.msra.mxu0 0
    %1238 = vmatprep.subr.bf16.mxu0 0
    %1239 = vmatpush1.bf16.msra.mxu0 0
    %1240 = vmatprep.subr.bf16.mxu0 0
    %1241 = vmatpush1.bf16.msra.mxu0 0
    %1242 = vmatprep.subr.bf16.mxu0 0
    %1243 = vmatpush1.bf16.msra.mxu0 0
    %1244 = vmatprep.mubr.bf16.mxu0 0
    %1245 = vmatmul.mubr.bf16.gmra.mrb[0].mxu0 %v1161
    %v1246 = vpop.f32.mrb[0].mxu0
    %v1247 = vadd.f32 0.0, %v1246
    %v1248 = vpop.f32.mrb[0].mxu0
    %v1249 = vadd.f32 0.0, %v1248
    %v1250 = vpop.f32.mrb[0].mxu0
    %v1251 = vpop.f32.mrb[0].mxu0
    %1252 = vdwg.mxu0
    %v1253 = vadd.f32 %v1167, %v1206
    %v1254 = vadd.f32 %v1168, %v1208
    %v1255 = vadd.f32 %v1169, %v1247
    %v1256 = vadd.f32 %v1170, %v1249
    %v1257 = vxor.u32 %v1253, 2147483648
    %v1258 = vmul.f32 %v1257, 1.442695
    %v1259 = vpow.pop %v1258
    %v1260 = vadd.f32 %v1259, 1.0
    %v1261 = vrcp.pop %v1260
    %v1262 = vmul.f32 1.0, %v1261
    %v1263 = vxor.u32 %v1254, 2147483648
    %v1264 = vmul.f32 %v1263, 1.442695
    %v1265 = vpow.pop %v1264
    %v1266 = vadd.f32 %v1265, 1.0
    %v1267 = vrcp.pop %v1266
    %v1268 = vmul.f32 1.0, %v1267
    %v1269 = vtanh.pop %v1255
    %v1270 = vxor.u32 %v1256, 2147483648
    %v1271 = vmul.f32 %v1270, 1.442695
    %v1272 = vpow.pop %v1271
    %v1273 = vadd.f32 %v1272, 1.0
    %v1274 = vrcp.pop %v1273
    %v1275 = vmul.f32 1.0, %v1274
    %v1276 = vmul.f32 %v1268, %v1158
    %v1277 = vmul.f32 %v1262, %v1269
    %v1278 = vadd.f32 %v1276, %v1277
    %v1279 = vtanh.pop %v1278
    %v1280 = vmul.f32 %v1275, %v1279
    %v1281 = vpack.c.bf16 %v1280, %v1280
    %s1282 = scalar_lea.vmem [#allocation14], 24
    %1283 = vst [vmem:[%s1282] sm:$0xf] %v1281
    %s1284 = smul.u32 7, 4
    %s1285 = smul.addr %s1284, 8
    %s1286 = scalar_lea.vmem [#allocation4], %s1285
    %v1287 = vld [vmem:[%s1286] sm:$0xff]
    %v1288 = vld [vmem:[%s1286 + $0x8] sm:$0xff]
    %v1289 = vld [vmem:[%s1286 + $0x10] sm:$0xff]
    %v1290 = vld [vmem:[%s1286 + $0x18] sm:$0xff]
    %1291 = vmatprep.subr.bf16.mxu0 %v411
    %1292 = vmatpush1.bf16.msra.mxu0 %v410
    %1293 = vmatprep.subr.bf16.mxu0 %v415
    %1294 = vmatpush1.bf16.msra.mxu0 %v414
    %1295 = vmatprep.subr.bf16.mxu0 %v419
    %1296 = vmatpush1.bf16.msra.mxu0 %v418
    %1297 = vmatprep.subr.bf16.mxu0 %v423
    %1298 = vmatpush1.bf16.msra.mxu0 %v422
    %1299 = vmatprep.subr.bf16.mxu0 %v427
    %1300 = vmatpush1.bf16.msra.mxu0 %v426
    %1301 = vmatprep.subr.bf16.mxu0 %v431
    %1302 = vmatpush1.bf16.msra.mxu0 %v430
    %1303 = vmatprep.subr.bf16.mxu0 %v435
    %1304 = vmatpush1.bf16.msra.mxu0 %v434
    %1305 = vmatprep.subr.bf16.mxu0 %v439
    %1306 = vmatpush1.bf16.msra.mxu0 %v438
    %1307 = vmatprep.subr.bf16.mxu0 0
    %1308 = vmatpush1.bf16.msra.mxu0 0
    %1309 = vmatprep.subr.bf16.mxu0 0
    %1310 = vmatpush1.bf16.msra.mxu0 0
    %1311 = vmatprep.subr.bf16.mxu0 0
    %1312 = vmatpush1.bf16.msra.mxu0 0
    %1313 = vmatprep.subr.bf16.mxu0 0
    %1314 = vmatpush1.bf16.msra.mxu0 0
    %1315 = vmatprep.subr.bf16.mxu0 0
    %1316 = vmatpush1.bf16.msra.mxu0 0
    %1317 = vmatprep.subr.bf16.mxu0 0
    %1318 = vmatpush1.bf16.msra.mxu0 0
    %1319 = vmatprep.subr.bf16.mxu0 0
    %1320 = vmatpush1.bf16.msra.mxu0 0
    %1321 = vmatprep.subr.bf16.mxu0 0
    %1322 = vmatpush1.bf16.msra.mxu0 0
    %1323 = vmatprep.mubr.bf16.mxu0 0
    %1324 = vmatmul.mubr.bf16.gmra.mrb[0].mxu0 %v1281
    %v1325 = vpop.f32.mrb[0].mxu0
    %v1326 = vadd.f32 0.0, %v1325
    %v1327 = vpop.f32.mrb[0].mxu0
    %v1328 = vadd.f32 0.0, %v1327
    %v1329 = vpop.f32.mrb[0].mxu0
    %v1330 = vpop.f32.mrb[0].mxu0
    %1331 = vdwg.mxu0
    %1332 = vmatprep.subr.bf16.mxu0 %v413
    %1333 = vmatpush1.bf16.msra.mxu0 %v412
    %1334 = vmatprep.subr.bf16.mxu0 %v417
    %1335 = vmatpush1.bf16.msra.mxu0 %v416
    %1336 = vmatprep.subr.bf16.mxu0 %v421
    %1337 = vmatpush1.bf16.msra.mxu0 %v420
    %1338 = vmatprep.subr.bf16.mxu0 %v425
    %1339 = vmatpush1.bf16.msra.mxu0 %v424
    %1340 = vmatprep.subr.bf16.mxu0 %v429
    %1341 = vmatpush1.bf16.msra.mxu0 %v428
    %1342 = vmatprep.subr.bf16.mxu0 %v433
    %1343 = vmatpush1.bf16.msra.mxu0 %v432
    %1344 = vmatprep.subr.bf16.mxu0 %v437
    %1345 = vmatpush1.bf16.msra.mxu0 %v436
    %1346 = vmatprep.subr.bf16.mxu0 %v441
    %1347 = vmatpush1.bf16.msra.mxu0 %v440
    %1348 = vmatprep.subr.bf16.mxu0 0
    %1349 = vmatpush1.bf16.msra.mxu0 0
    %1350 = vmatprep.subr.bf16.mxu0 0
    %1351 = vmatpush1.bf16.msra.mxu0 0
    %1352 = vmatprep.subr.bf16.mxu0 0
    %1353 = vmatpush1.bf16.msra.mxu0 0
    %1354 = vmatprep.subr.bf16.mxu0 0
    %1355 = vmatpush1.bf16.msra.mxu0 0
    %1356 = vmatprep.subr.bf16.mxu0 0
    %1357 = vmatpush1.bf16.msra.mxu0 0
    %1358 = vmatprep.subr.bf16.mxu0 0
    %1359 = vmatpush1.bf16.msra.mxu0 0
    %1360 = vmatprep.subr.bf16.mxu0 0
    %1361 = vmatpush1.bf16.msra.mxu0 0
    %1362 = vmatprep.subr.bf16.mxu0 0
    %1363 = vmatpush1.bf16.msra.mxu0 0
    %1364 = vmatprep.mubr.bf16.mxu0 0
    %1365 = vmatmul.mubr.bf16.gmra.mrb[0].mxu0 %v1281
    %v1366 = vpop.f32.mrb[0].mxu0
    %v1367 = vadd.f32 0.0, %v1366
    %v1368 = vpop.f32.mrb[0].mxu0
    %v1369 = vadd.f32 0.0, %v1368
    %v1370 = vpop.f32.mrb[0].mxu0
    %v1371 = vpop.f32.mrb[0].mxu0
    %1372 = vdwg.mxu0
    %v1373 = vadd.f32 %v1287, %v1326
    %v1374 = vadd.f32 %v1288, %v1328
    %v1375 = vadd.f32 %v1289, %v1367
    %v1376 = vadd.f32 %v1290, %v1369
    %v1377 = vxor.u32 %v1373, 2147483648
    %v1378 = vmul.f32 %v1377, 1.442695
    %v1379 = vpow.pop %v1378
    %v1380 = vadd.f32 %v1379, 1.0
    %v1381 = vrcp.pop %v1380
    %v1382 = vmul.f32 1.0, %v1381
    %v1383 = vxor.u32 %v1374, 2147483648
    %v1384 = vmul.f32 %v1383, 1.442695
    %v1385 = vpow.pop %v1384
    %v1386 = vadd.f32 %v1385, 1.0
    %v1387 = vrcp.pop %v1386
    %v1388 = vmul.f32 1.0, %v1387
    %v1389 = vtanh.pop %v1375
    %v1390 = vxor.u32 %v1376, 2147483648
    %v1391 = vmul.f32 %v1390, 1.442695
    %v1392 = vpow.pop %v1391
    %v1393 = vadd.f32 %v1392, 1.0
    %v1394 = vrcp.pop %v1393
    %v1395 = vmul.f32 1.0, %v1394
    %v1396 = vmul.f32 %v1388, %v1278
    %v1397 = vmul.f32 %v1382, %v1389
    %v1398 = vadd.f32 %v1396, %v1397
    %v1399 = vtanh.pop %v1398
    %v1400 = vmul.f32 %v1395, %v1399
    %v1401 = vpack.c.bf16 %v1400, %v1400
    %s1402 = scalar_lea.vmem [#allocation14], 28
    %1403 = vst [vmem:[%s1402] sm:$0xf] %v1401
    %1404 = vst [vmem:[#allocation5] sm:$0xff] %v1400
    %1405 = vst [vmem:[#allocation6] sm:$0xff] %v1398
    // Predicated region
    $region34: #{tpu_custom_call.1} parent=1 // pred_check
      %p1406 = pneg %p62
    $region35: #{tpu_custom_call.1} parent=1 // pred_check_branch
      %1408 = sbr.rel (%p1406) target = $region37
    $region36: #{tpu_custom_call.1} parent=1 // pred_region
      %1409 = vst [vmem:[#allocation15] sm:$0xff] %v1400
      %1410 = vst [vmem:[#allocation17] sm:$0xff] %v1398
    $region37: #{tpu_custom_call.1} parent=1 // pred_fallthru
      _
    // Predicated region
    $region38: #{tpu_custom_call.1} parent=1 // pred_check
      _
    $region39: #{tpu_custom_call.1} parent=1 // pred_check_branch
      %1412 = sbr.rel (0) target = $region41
    $region40: #{tpu_custom_call.1} parent=1 // pred_region
      %s1414 = ssub.s32 512, 512
      %1415 = vsyncadd [#allocation10], %s1414
      %s1416 = sshll.u32 [#allocation14], 4
      %s1417 = int_to_ptr.vmem [resolvable:$true] %s1416
      %1422 = dma.vmem_to_hbm [thread:$0]  %s1417, 512, %s6, [#allocation10], 64, 64, 4
    $region41: #{tpu_custom_call.1} parent=1 // pred_fallthru
      _
    // Predicated region
    $region42: #{tpu_custom_call.1} parent=1 // pred_check
      _
    $region43: #{tpu_custom_call.1} parent=1 // pred_check_branch
      %1424 = sbr.rel (0) target = $region45
    $region44: #{tpu_custom_call.1} parent=1 // pred_region
      %s1426 = ssub.s32 128, 128
      %1427 = vsyncadd [#allocation16], %s1426
      %s1429 = sshll.u32 [#allocation15], 4
      %s1430 = int_to_ptr.vmem [resolvable:$true] %s1429
      %1432 = dma.vmem_to_hbm [thread:$0]  %s1430, 128, %s7, [#allocation16]
    $region45: #{tpu_custom_call.1} parent=1 // pred_fallthru
      _
    // Predicated region
    $region46: #{tpu_custom_call.1} parent=1 // pred_check
      _
    $region47: #{tpu_custom_call.1} parent=1 // pred_check_branch
      %1434 = sbr.rel (0) target = $region49
    $region48: #{tpu_custom_call.1} parent=1 // pred_region
      %s1436 = ssub.s32 128, 128
      %1437 = vsyncadd [#allocation16], %s1436
      %s1439 = sshll.u32 [#allocation17], 4
      %s1440 = int_to_ptr.vmem [resolvable:$true] %s1439
      %1442 = dma.vmem_to_hbm [thread:$0]  %s1440, 128, %s8, [#allocation16]
    $region49: #{tpu_custom_call.1} parent=1 // pred_fallthru
      _
    // Predicated region
    $region50: #{tpu_custom_call.1} parent=1 // pred_check
      _
    $region51: #{tpu_custom_call.1} parent=1 // pred_check_branch
      %1444 = sbr.rel (0) target = $region53
    $region52: #{tpu_custom_call.1} parent=1 // pred_region
      %1445 = dma.done [#allocation10], 512
    $region53: #{tpu_custom_call.1} parent=1 // pred_fallthru
      _
    // Predicated region
    $region54: #{tpu_custom_call.1} parent=1 // pred_check
      _
    $region55: #{tpu_custom_call.1} parent=1 // pred_check_branch
      %1447 = sbr.rel (0) target = $region57
    $region56: #{tpu_custom_call.1} parent=1 // pred_region
      %1448 = dma.done [#allocation16], 128
    $region57: #{tpu_custom_call.1} parent=1 // pred_fallthru
      _
    // Predicated region
    $region58: #{tpu_custom_call.1} parent=1 // pred_check
      _
    $region59: #{tpu_custom_call.1} parent=1 // pred_check_branch
      %1450 = sbr.rel (0) target = $region61
    $region60: #{tpu_custom_call.1} parent=1 // pred_region
      %1451 = dma.done [#allocation16], 128
    $region61: #{tpu_custom_call.1} parent=1 // pred_fallthru
      _
    %1452 = vsyncpa [#allocation9], 1
    %1453 = vsyncpa [#allocation12], 1
    %1454 = vsyncpa [#allocation10], 1
    %1455 = vsyncpa [#allocation16], 1
  %1456 = vsyncmov [#allocation7]
  %s1457 = vpop.sfrf %1456
  %p1458 = scmp.eq.s32.totalorder %s1457, 0
  %p1459 = pneg %p1458
  %1461 = shalt.err (%p1459)
  %s1462 = scalar_lea.sflag [#allocation7], 1
  %1463 = vsyncmov %s1462
  %s1464 = vpop.sfrf %1463
  %p1465 = scmp.eq.s32.totalorder %s1464, 0
  %p1466 = pneg %p1465
  %1468 = shalt.err (%p1466)

</llo_original>
